<compile_context>
chip_gen: v7x
topology: tpu7x:2x2x1
jax: 0.10.0
libtpu: 0.0.40
codegen_flags: <defaults>
</compile_context>

<pallas_src>
import math

import jax
import jax.numpy as jnp
from jax.experimental import pallas as pl
from jax.experimental.pallas import tpu as pltpu

# ---------------- model dimensions ----------------
BATCH = 2
QUERY_DIM = 4
HEIGHT = WIDTH = 64                  # required by restore_channels -> view(B, C, 64, 64)
NUM_GENES = 40
GENE_DIM = 32
NUM_HEADS = 8
HEAD_DIM = GENE_DIM // NUM_HEADS
SPARSITY = 0.3
TOP_K = int(NUM_GENES * SPARSITY)    # int() truncation, like torch
OUT_FEATURES = HEIGHT * WIDTH        # 4096

M_ROWS = BATCH * QUERY_DIM           # flattened (batch, query) rows = 8
KV_ROWS = 2 * QUERY_DIM              # keys/values per batch = 8
QH = QUERY_DIM * NUM_HEADS           # stacked (head, query) rows per batch = 32

TILE_N = 2048                        # lane tile for restore_channels
GRID_N = OUT_FEATURES // TILE_N      # = 2  (one tile per TensorCore on v7x)

_F32 = jnp.float32

# ----- consolidated parameter-block layout (single f32 [P_ROWS, 128] buffer) -----
(_R_GM, _R_AWS, _R_AB, _R_QV, _R_QB, _R_BKV, _R_BOUT, _R_SELP, _R_SELN) = range(9)
R_WKV = 16                           # rows 16..47 : fused [WK|WV] weight (32, 64)
R_WOUT = R_WKV + GENE_DIM            # rows 48..79 : MHA out-proj weight (32, 32)
R_SEGQ = R_WOUT + GENE_DIM           # rows 80..111: head segment mask   (32, 32)
R_FOLD = R_SEGQ + QH                 # rows 112..119: head fold matrix   (8, 64)
P_ROWS = R_FOLD + M_ROWS             # 120 (multiple of 8)


# =====================================================================
# Fused kernel: grid = (GRID_N,), each step computes the (cheap) attention
# prologue and one lane-dense 2048-wide tile of restore_channels.
# =====================================================================
def fused_gmn_kernel(x_ref, pp_ref, rw_ref, rb_ref, out_ref):
    D, N, H = GENE_DIM, NUM_GENES, NUM_HEADS
    B, Q, KV = BATCH, QUERY_DIM, KV_ROWS

    # ---- static views into the consolidated parameter block ----
    gene_mean = pp_ref[_R_GM:_R_GM + 1, 0:N]            # (1, N)
    aw_colsum = pp_ref[_R_AWS:_R_AWS + 1, 0:D]           # (1, D)
    ab        = pp_ref[_R_AB:_R_AB + 1, 0:D]
    qp_vec    = pp_ref[_R_QV:_R_QV + 1, 0:D]
    qp_bias   = pp_ref[_R_QB:_R_QB + 1, 0:D]
    b_kv      = pp_ref[_R_BKV:_R_BKV + 1, 0:2 * D]       # (1, 2D)
    b_out     = pp_ref[_R_BOUT:_R_BOUT + 1, 0:D]
    sel_pos   = pp_ref[_R_SELP:_R_SELP + 1, 0:N]         # top-K gene mask
    sel_neg   = pp_ref[_R_SELN:_R_SELN + 1, 0:N]         # bottom-K gene mask
    w_kv      = pp_ref[R_WKV:R_WKV + D, 0:2 * D]          # (D, 2D)
    w_out     = pp_ref[R_WOUT:R_WOUT + D, 0:D]            # (D, D)
    segq      = pp_ref[R_SEGQ:R_SEGQ + QH, 0:D]           # (QH, D) 0/1 head mask
    fold      = pp_ref[R_FOLD:R_FOLD + M_ROWS, 0:B * QH]  # (M, B*QH) 0/1 fold

    # ---- spatial mean: queries[b,q,:] = m[b,q] * ones(D)  (rank-1) ----
    x = x_ref[...]                                        # (M, H*W)
    m = jnp.mean(x, axis=-1, keepdims=True)               # (M, 1)

    # adaptive_layer(task): task is a constant vector = mean(m) * ones(D)
    t = jnp.mean(m, axis=(0, 1), keepdims=True)           # (1, 1)
    adapt_row = t * aw_colsum + ab                         # (1, D)

    # scores[m, n] = m[m] * (D * gene_mean[n] + sum(adapt_row))
    row_total = float(D) * gene_mean + jnp.sum(adapt_row, axis=-1, keepdims=True)
    scores = m * row_total                                 # (M, N)

    # ---- gene selection: sets were precomputed (ordering of scores over n
    # equals ordering of gene_mean, flipped when m < 0).  m == 0 (all scores
    # tied) is a measure-zero case handled as "m >= 0".
    pos = (m >= 0.0).astype(_F32)                          # (M, 1)
    selected = pos * sel_pos + (1.0 - pos) * sel_neg       # (M, N)

    neg_big = jnp.float32(-1e30)
    masked = jnp.where(selected > 0.5, scores, neg_big)
    smax = jnp.max(masked, axis=-1, keepdims=True)
    e = jnp.exp(masked - smax)
    sparse_w = e / jnp.sum(e, axis=-1, keepdims=True)      # (M, N)

    # weighted memory: (w . gene_mean) + adapt_row  (weights sum to 1)
    wg = jnp.sum(sparse_w * gene_mean, axis=-1, keepdims=True)   # (M, 1)
    weighted = wg + adapt_row                                     # (M, D)

    local3 = jnp.broadcast_to(m.reshape(B, Q, 1), (B, Q, D))      # (B, Q, D)
    weighted3 = weighted.reshape(B, Q, D)
    combined = jnp.concatenate([local3, weighted3], axis=1)       # (B, KV, D)

    # ---- fused K/V path: one (16,32)@(32,64) matmul (WK->k_in and WV->v_in
    # chains folded and concatenated in preprocess_params) ----
    kv = jnp.dot(combined.reshape(B * KV, D), w_kv,
                 preferred_element_type=_F32) + b_kv               # (B*KV, 2D)
    k_p3 = kv[:, :D].reshape(B, KV, D)
    v_p3 = kv[:, D:].reshape(B, KV, D)

    # ---- fused Q path: rank-1, no matmul at all ----
    q_p3 = (m * qp_vec + qp_bias).reshape(B, Q, D)                 # (B, Q, D)

    # ---- 8-head attention collapsed into one pass ----
    # stack queries over heads (row n = h*Q + q) and mask each block to its head
    q_stack = jnp.concatenate([q_p3] * H, axis=1) * segq           # (B, QH, D)
    scale = 1.0 / math.sqrt(HEAD_DIM)
    logits = jnp.einsum("bnd,bkd->bnk", q_stack, k_p3,
                        preferred_element_type=_F32) * scale        # (B, QH, KV)
    lmax = jnp.max(logits, axis=-1, keepdims=True)
    le = jnp.exp(logits - lmax)
    attn = le / jnp.sum(le, axis=-1, keepdims=True)                 # one softmax, all heads
    ctxn = jnp.einsum("bnk,bkd->bnd", attn, v_p3,
                      preferred_element_type=_F32)                   # (B, QH, D)
    ctxm = (ctxn * segq).reshape(B * QH, D)                          # keep head-own lanes
    ctx = jnp.dot(fold, ctxm, preferred_element_type=_F32)           # (M, D) recombine heads

    attn_out = jnp.dot(ctx, w_out, preferred_element_type=_F32) + b_out   # (M, D)

    # ---- per-tile restore_channels projection (bf16 weights, f32 accumulate) ----
    a = attn_out.astype(rw_ref.dtype)                                # (M, D) bf16
    out_ref[...] = (jnp.dot(a, rw_ref[...], preferred_element_type=_F32)
                    + rb_ref[...])


# =====================================================================
# Host wrappers
# =====================================================================
def preprocess_params(params):
    """Hoist ALL x-independent work out of the forward path (runs once)."""
    D, N, H, Q = GENE_DIM, NUM_GENES, NUM_HEADS, QUERY_DIM
    w = params["w_stack"]
    b = params["b_stack"]
    wq, wk, wv, wqi, wki, wvi, wo = (w[i] for i in range(7))
    bq, bk, bv, bqi, bki, bvi, bo = (b[i] for i in range(7))     # each (1, D)

    gene_mean = params["memory_bank"].mean(axis=-1)              # (N,)
    aw_colsum = params["adaptive_w"].sum(axis=0)                 # (D,)
    ab = params["adaptive_b"][0]                                 # (D,)

    # q chain folds to rank-1: q_p = m * qp_vec + qp_bias
    qp_vec = (wq.sum(axis=0, keepdims=True) @ wqi)[0]            # (D,)
    qp_bias = (bq @ wqi + bqi)[0]                                # (D,)

    # chained K / V linears folded, then concatenated: kv = combined @ w_kv + b_kv
    w_kv = jnp.concatenate([wk @ wki, wv @ wvi], axis=1)         # (D, 2D)
    b_kv = jnp.concatenate([bk @ wki + bki, bv @ wvi + bvi], axis=1)[0]   # (2D,)

    # gene selection masks: score ordering == gene_mean ordering (up to sign(m))
    _, top_idx = jax.lax.top_k(gene_mean, TOP_K)
    _, bot_idx = jax.lax.top_k(-gene_mean, TOP_K)
    sel_pos = jnp.zeros((N,), _F32).at[top_idx].set(1.0)
    sel_neg = jnp.zeros((N,), _F32).at[bot_idx].set(1.0)

    # head segment mask for stacked-query rows n = h*Q + q
    head_of_d = jnp.arange(D) // HEAD_DIM                        # (D,)
    head_of_row = jnp.arange(QH) // Q                            # (QH,)
    segq = (head_of_row[:, None] == head_of_d[None, :]).astype(_F32)      # (QH, D)

    # fold matrix: output row r=(b,q) sums stacked rows n=(b,h,q) over h
    n_idx = jnp.arange(BATCH * QH)
    r_idx = jnp.arange(M_ROWS)
    fold = ((n_idx[None, :] // QH == r_idx[:, None] // Q) &
            (n_idx[None, :] % Q == r_idx[:, None] % Q)).astype(_F32)      # (M, B*QH)

    # pack everything prologue-only into ONE lane-dense f32 block
    blk = jnp.zeros((P_ROWS, 128), _F32)
    blk = blk.at[_R_GM, :N].set(gene_mean)
    blk = blk.at[_R_AWS, :D].set(aw_colsum)
    blk = blk.at[_R_AB, :D].set(ab)
    blk = blk.at[_R_QV, :D].set(qp_vec)
    blk = blk.at[_R_QB, :D].set(qp_bias)
    blk = blk.at[_R_BKV, :2 * D].set(b_kv)
    blk = blk.at[_R_BOUT, :D].set(bo[0])
    blk = blk.at[_R_SELP, :N].set(sel_pos)
    blk = blk.at[_R_SELN, :N].set(sel_neg)
    blk = blk.at[R_WKV:R_WKV + D, :2 * D].set(w_kv)
    blk = blk.at[R_WOUT:R_WOUT + D, :D].set(wo)
    blk = blk.at[R_SEGQ:R_SEGQ + QH, :D].set(segq)
    blk = blk.at[R_FOLD:R_FOLD + M_ROWS, :BATCH * QH].set(fold)

    return {
        "pblock": blk,
        "rest_w": params["rest_w"].astype(jnp.bfloat16),          # (D, 4096) bf16
        "rest_b": params["rest_b"],                                # (1, 4096)
    }


@jax.jit
def gene_memory_network_forward(x, prep):
    B, Q, H, W = x.shape
    x2d = x.reshape(B * Q, H * W)                                  # (8, 4096)

    out2d = pl.pallas_call(
        fused_gmn_kernel,
        grid=(GRID_N,),
        in_specs=[
            pl.BlockSpec((M_ROWS, HEIGHT * WIDTH), lambda i: (0, 0)),   # x (fetched once)
            pl.BlockSpec((P_ROWS, 128), lambda i: (0, 0)),              # consolidated params
            pl.BlockSpec((GENE_DIM, TILE_N), lambda i: (0, i)),         # rest_w tile (bf16)
            pl.BlockSpec((1, TILE_N), lambda i: (0, i)),                # rest_b tile
        ],
        out_specs=pl.BlockSpec((M_ROWS, TILE_N), lambda i: (0, i)),     # lane-dense output
        out_shape=jax.ShapeDtypeStruct((M_ROWS, OUT_FEATURES), _F32),
        # Prologue is recomputed per step (no cross-step scratch), so the grid
        # axis is safely "parallel": on v7x the two tiles split across both
        # TensorCores; on v5e/v6e they run back-to-back on one core.
        compiler_params=pltpu.CompilerParams(dimension_semantics=("parallel",)),
    )(x2d, prep["pblock"], prep["rest_w"], prep["rest_b"])

    return out2d.reshape(B, Q, H, W)


# =====================================================================
# Pure-JAX reference (mirrors the PyTorch forward) for a sanity check
# =====================================================================
def reference_forward(x, p):
    B, Q, H, W = x.shape
    m = x.mean(axis=(2, 3))                                       # [B, Q]
    queries = jnp.broadcast_to(m[:, :, None], (B, Q, GENE_DIM))
    gene_mean = p["memory_bank"].mean(axis=-1)                    # [N]
    global_memory = jnp.broadcast_to(gene_mean[:, None], (NUM_GENES, GENE_DIM))
    task = queries.mean(axis=0).mean(axis=0)                      # [D]
    adapted = global_memory + (task @ p["adaptive_w"] + p["adaptive_b"][0])
    scores = jnp.einsum("bqd,nd->bqn", queries, adapted)
    topk_scores, topk_idx = jax.lax.top_k(scores, TOP_K)
    sparse_memory = adapted[topk_idx]                             # [B, Q, K, D]
    sparse_weights = jax.nn.softmax(topk_scores, axis=-1)
    weighted = jnp.einsum("bqt,bqtd->bqd", sparse_weights, sparse_memory)
    local_exp = jnp.broadcast_to(m[:, :, None], (B, Q, GENE_DIM))
    combined = jnp.concatenate([local_exp, weighted], axis=1)     # [B, 2Q, D]

    def lin(v, w, b):
        return v @ w + b

    ws = [p["w_stack"][i] for i in range(7)]
    bs = [p["b_stack"][i, 0] for i in range(7)]
    q_lin = lin(queries, ws[0], bs[0])
    k_lin = lin(combined, ws[1], bs[1])
    v_lin = lin(combined, ws[2], bs[2])
    q_p = lin(q_lin, ws[3], bs[3])
    k_p = lin(k_lin, ws[4], bs[4])
    v_p = lin(v_lin, ws[5], bs[5])
    scale = 1.0 / math.sqrt(HEAD_DIM)
    ctx = []
    for h in range(NUM_HEADS):
        sl = slice(h * HEAD_DIM, (h + 1) * HEAD_DIM)
        logits = jnp.einsum("bqd,bkd->bqk", q_p[..., sl], k_p[..., sl]) * scale
        attn = jax.nn.softmax(logits, axis=-1)
        ctx.append(jnp.einsum("bqk,bkd->bqd", attn, v_p[..., sl]))
    ctx = jnp.concatenate(ctx, axis=-1)
    attn_out = lin(ctx, ws[6], bs[6])
    restored = attn_out @ p["rest_w"] + p["rest_b"][0]
    return restored.reshape(B, Q, H, W)


# =====================================================================
if __name__ == "__main__":
    key = jax.random.PRNGKey(0)
    ks = jax.random.split(key, 8)

    def rinit(k, shape, scale=0.05):
        return (scale * jax.random.normal(k, shape)).astype(_F32)

    params = {
        "memory_bank": rinit(ks[0], (NUM_GENES, NUM_GENES), scale=1.0),
        "adaptive_w": rinit(ks[1], (GENE_DIM, GENE_DIM)),
        "adaptive_b": rinit(ks[2], (1, GENE_DIM)),
        # stacked [in, out] weights: WQ, WK, WV, MHA q_in, k_in, v_in, out_proj
        "w_stack": rinit(ks[3], (7, GENE_DIM, GENE_DIM)),
        "b_stack": rinit(ks[4], (7, 1, GENE_DIM)),
        "rest_w": rinit(ks[5], (GENE_DIM, OUT_FEATURES)),
        "rest_b": rinit(ks[6], (1, OUT_FEATURES)),
    }
    x = jax.random.normal(ks[7], (BATCH, QUERY_DIM, HEIGHT, WIDTH), dtype=_F32)

    prep = preprocess_params(params)    # param-only work, hoisted out of forward

    out = jax.block_until_ready(gene_memory_network_forward(x, prep))
    assert out.shape == (BATCH, QUERY_DIM, HEIGHT, WIDTH)

    ref = jax.block_until_ready(reference_forward(x, params))
    max_diff = float(jnp.max(jnp.abs(out - ref)))
    assert jnp.allclose(out, ref, rtol=5e-2, atol=1e-2), max_diff

    print("KERNEL_OK")
</pallas_src>

<mosaic_0001>
module attributes {stable_mosaic.version = 11 : i64} {
  func.func @fused_gmn_kernel(%arg0: i32, %arg1: memref<8x4096xf32, #tpu.memory_space<vmem>>, %arg2: memref<120x128xf32, #tpu.memory_space<vmem>>, %arg3: memref<32x2048xbf16, #tpu.memory_space<vmem>>, %arg4: memref<1x2048xf32, #tpu.memory_space<vmem>>, %arg5: memref<8x2048xf32, #tpu.memory_space<vmem>>) attributes {dimension_semantics = [#tpu.dimension_semantics<parallel>], iteration_bounds = array<i64: 2>, scalar_prefetch = 0 : i64, scratch_operands = 0 : i64, tpu.core_type = #tpu.core_type<tc>, window_params = [{pipeline_mode = #tpu.pipeline_mode<synchronous>, transform_indices = @transform_0, window_bounds = array<i64: 8, 4096>}, {pipeline_mode = #tpu.pipeline_mode<synchronous>, transform_indices = @transform_1, window_bounds = array<i64: 120, 128>}, {transform_indices = @transform_2, window_bounds = array<i64: 32, 2048>}, {transform_indices = @transform_3, window_bounds = array<i64: 1, 2048>}, {transform_indices = @transform_4, window_bounds = array<i64: 8, 2048>}]} {
    %c0 = arith.constant 0 : index
    %c0_0 = arith.constant 0 : index
    %0 = vector.load %arg2[%c0, %c0_0] : memref<120x128xf32, #tpu.memory_space<vmem>>, vector<1x40xf32>
    %c1 = arith.constant 1 : index
    %c0_1 = arith.constant 0 : index
    %1 = vector.load %arg2[%c1, %c0_1] : memref<120x128xf32, #tpu.memory_space<vmem>>, vector<1x32xf32>
    %c2 = arith.constant 2 : index
    %c0_2 = arith.constant 0 : index
    %2 = vector.load %arg2[%c2, %c0_2] : memref<120x128xf32, #tpu.memory_space<vmem>>, vector<1x32xf32>
    %c3 = arith.constant 3 : index
    %c0_3 = arith.constant 0 : index
    %3 = vector.load %arg2[%c3, %c0_3] : memref<120x128xf32, #tpu.memory_space<vmem>>, vector<1x32xf32>
    %c4 = arith.constant 4 : index
    %c0_4 = arith.constant 0 : index
    %4 = vector.load %arg2[%c4, %c0_4] : memref<120x128xf32, #tpu.memory_space<vmem>>, vector<1x32xf32>
    %c5 = arith.constant 5 : index
    %c0_5 = arith.constant 0 : index
    %5 = vector.load %arg2[%c5, %c0_5] : memref<120x128xf32, #tpu.memory_space<vmem>>, vector<1x64xf32>
    %c6 = arith.constant 6 : index
    %c0_6 = arith.constant 0 : index
    %6 = vector.load %arg2[%c6, %c0_6] : memref<120x128xf32, #tpu.memory_space<vmem>>, vector<1x32xf32>
    %c7 = arith.constant 7 : index
    %c0_7 = arith.constant 0 : index
    %7 = vector.load %arg2[%c7, %c0_7] : memref<120x128xf32, #tpu.memory_space<vmem>>, vector<1x40xf32>
    %c8 = arith.constant 8 : index
    %c0_8 = arith.constant 0 : index
    %8 = vector.load %arg2[%c8, %c0_8] : memref<120x128xf32, #tpu.memory_space<vmem>>, vector<1x40xf32>
    %c16 = arith.constant 16 : index
    %c0_9 = arith.constant 0 : index
    %9 = vector.load %arg2[%c16, %c0_9] : memref<120x128xf32, #tpu.memory_space<vmem>>, vector<32x64xf32>
    %c48 = arith.constant 48 : index
    %c0_10 = arith.constant 0 : index
    %10 = vector.load %arg2[%c48, %c0_10] : memref<120x128xf32, #tpu.memory_space<vmem>>, vector<32x32xf32>
    %c80 = arith.constant 80 : index
    %c0_11 = arith.constant 0 : index
    %11 = vector.load %arg2[%c80, %c0_11] : memref<120x128xf32, #tpu.memory_space<vmem>>, vector<32x32xf32>
    %c112 = arith.constant 112 : index
    %c0_12 = arith.constant 0 : index
    %12 = vector.load %arg2[%c112, %c0_12] : memref<120x128xf32, #tpu.memory_space<vmem>>, vector<8x64xf32>
    %c0_13 = arith.constant 0 : index
    %c0_14 = arith.constant 0 : index
    %13 = vector.load %arg1[%c0_13, %c0_14] : memref<8x4096xf32, #tpu.memory_space<vmem>>, vector<8x4096xf32>
    %cst = arith.constant dense<0.000000e+00> : vector<8xf32>
    %14 = vector.multi_reduction <add>, %13, %cst [1] : vector<8x4096xf32> to vector<8xf32>
    %15 = vector.shape_cast %14 : vector<8xf32> to vector<8x1xf32>
    %cst_15 = arith.constant 4.096000e+03 : f32
    %16 = vector.broadcast %cst_15 : f32 to vector<8x1xf32>
    %17 = arith.divf %15, %16 : vector<8x1xf32>
    %18 = vector.shape_cast %17 : vector<8x1xf32> to vector<1x8x1xf32>
    %cst_16 = arith.constant dense<0.000000e+00> : vector<1xf32>
    %19 = vector.multi_reduction <add>, %18, %cst_16 [1, 2] : vector<1x8x1xf32> to vector<1xf32>
    %20 = vector.shape_cast %19 : vector<1xf32> to vector<1x1x1xf32>
    %21 = vector.extract %20[0, 0, 0] : f32 from vector<1x1x1xf32>
    %22 = vector.broadcast %21 : f32 to vector<1x1xf32>
    %cst_17 = arith.constant 8.000000e+00 : f32
    %23 = vector.broadcast %cst_17 : f32 to vector<1x1xf32>
    %24 = arith.divf %22, %23 : vector<1x1xf32>
    %25 = vector.broadcast %24 : vector<1x1xf32> to vector<1x32xf32>
    %26 = arith.mulf %25, %1 : vector<1x32xf32>
    %27 = arith.addf %26, %2 : vector<1x32xf32>
    %cst_18 = arith.constant 3.200000e+01 : f32
    %28 = vector.broadcast %cst_18 : f32 to vector<1x40xf32>
    %29 = arith.mulf %28, %0 : vector<1x40xf32>
    %cst_19 = arith.constant dense<0.000000e+00> : vector<1xf32>
    %30 = vector.multi_reduction <add>, %27, %cst_19 [1] : vector<1x32xf32> to vector<1xf32>
    %31 = vector.shape_cast %30 : vector<1xf32> to vector<1x1xf32>
    %32 = vector.broadcast %31 : vector<1x1xf32> to vector<1x40xf32>
    %33 = arith.addf %29, %32 : vector<1x40xf32>
    %34 = vector.broadcast %17 : vector<8x1xf32> to vector<8x40xf32>
    %35 = vector.broadcast %33 : vector<1x40xf32> to vector<8x40xf32>
    %36 = arith.mulf %34, %35 : vector<8x40xf32>
    %cst_20 = arith.constant 0.000000e+00 : f32
    %37 = vector.broadcast %cst_20 : f32 to vector<8x1xf32>
    %38 = arith.cmpf oge, %17, %37 : vector<8x1xf32>
    %39 = arith.extui %38 : vector<8x1xi1> to vector<8x1xi32>
    %40 = arith.sitofp %39 : vector<8x1xi32> to vector<8x1xf32>
    %41 = vector.broadcast %40 : vector<8x1xf32> to vector<8x40xf32>
    %42 = vector.broadcast %7 : vector<1x40xf32> to vector<8x40xf32>
    %43 = arith.mulf %41, %42 : vector<8x40xf32>
    %cst_21 = arith.constant 1.000000e+00 : f32
    %44 = vector.broadcast %cst_21 : f32 to vector<8x1xf32>
    %45 = arith.subf %44, %40 : vector<8x1xf32>
    %46 = vector.broadcast %45 : vector<8x1xf32> to vector<8x40xf32>
    %47 = vector.broadcast %8 : vector<1x40xf32> to vector<8x40xf32>
    %48 = arith.mulf %46, %47 : vector<8x40xf32>
    %49 = arith.addf %43, %48 : vector<8x40xf32>
    %cst_22 = arith.constant 5.000000e-01 : f32
    %50 = vector.broadcast %cst_22 : f32 to vector<8x40xf32>
    %51 = arith.cmpf ogt, %49, %50 : vector<8x40xf32>
    %cst_23 = arith.constant -1.000000e+30 : f32
    %52 = vector.broadcast %cst_23 : f32 to vector<8x40xf32>
    %53 = arith.select %51, %36, %52 : vector<8x40xi1>, vector<8x40xf32>
    %cst_24 = arith.constant dense<0xFF800000> : vector<8xf32>
    %54 = vector.multi_reduction <maximumf>, %53, %cst_24 [1] : vector<8x40xf32> to vector<8xf32>
    %55 = vector.shape_cast %54 : vector<8xf32> to vector<8x1xf32>
    %56 = vector.broadcast %55 : vector<8x1xf32> to vector<8x40xf32>
    %57 = arith.subf %53, %56 : vector<8x40xf32>
    %58 = math.exp %57 : vector<8x40xf32>
    %cst_25 = arith.constant dense<0.000000e+00> : vector<8xf32>
    %59 = vector.multi_reduction <add>, %58, %cst_25 [1] : vector<8x40xf32> to vector<8xf32>
    %60 = vector.shape_cast %59 : vector<8xf32> to vector<8x1xf32>
    %61 = vector.broadcast %60 : vector<8x1xf32> to vector<8x40xf32>
    %62 = arith.divf %58, %61 : vector<8x40xf32>
    %63 = vector.broadcast %0 : vector<1x40xf32> to vector<8x40xf32>
    %64 = arith.mulf %62, %63 : vector<8x40xf32>
    %cst_26 = arith.constant dense<0.000000e+00> : vector<8xf32>
    %65 = vector.multi_reduction <add>, %64, %cst_26 [1] : vector<8x40xf32> to vector<8xf32>
    %66 = vector.shape_cast %65 : vector<8xf32> to vector<8x1xf32>
    %67 = vector.broadcast %66 : vector<8x1xf32> to vector<8x32xf32>
    %68 = vector.broadcast %27 : vector<1x32xf32> to vector<8x32xf32>
    %69 = arith.addf %67, %68 : vector<8x32xf32>
    %70 = vector.shape_cast %17 : vector<8x1xf32> to vector<2x4x1xf32>
    %71 = vector.shape_cast %70 : vector<2x4x1xf32> to vector<2x4x1xf32>
    %72 = vector.broadcast %71 : vector<2x4x1xf32> to vector<2x4x32xf32>
    %73 = vector.shape_cast %69 : vector<8x32xf32> to vector<2x4x32xf32>
    %74 = tpu.concatenate %72, %73 in 1 : vector<2x4x32xf32>, vector<2x4x32xf32> -> vector<2x8x32xf32>
    %75 = vector.shape_cast %74 : vector<2x8x32xf32> to vector<16x32xf32>
    %cst_27 = arith.constant dense<0.000000e+00> : vector<16x64xf32>
    %76 = tpu.matmul %75, %9, %cst_27 {dimension_numbers = #tpu.dot_dimension_numbers<[1], [0], [0], [1], [0, 0, 1, 1], [], []>} : vector<16x32xf32>, vector<32x64xf32>, vector<16x64xf32> -> vector<16x64xf32>
    %77 = vector.broadcast %5 : vector<1x64xf32> to vector<16x64xf32>
    %78 = arith.addf %76, %77 : vector<16x64xf32>
    %79 = vector.extract_strided_slice %78 {offsets = [0, 0], sizes = [16, 32], strides = [1, 1]} : vector<16x64xf32> to vector<16x32xf32>
    %80 = vector.shape_cast %79 : vector<16x32xf32> to vector<2x8x32xf32>
    %81 = vector.extract_strided_slice %78 {offsets = [0, 32], sizes = [16, 32], strides = [1, 1]} : vector<16x64xf32> to vector<16x32xf32>
    %82 = vector.shape_cast %81 : vector<16x32xf32> to vector<2x8x32xf32>
    %83 = vector.broadcast %17 : vector<8x1xf32> to vector<8x32xf32>
    %84 = vector.broadcast %3 : vector<1x32xf32> to vector<8x32xf32>
    %85 = arith.mulf %83, %84 : vector<8x32xf32>
    %86 = vector.broadcast %4 : vector<1x32xf32> to vector<8x32xf32>
    %87 = arith.addf %85, %86 : vector<8x32xf32>
    %88 = vector.shape_cast %87 : vector<8x32xf32> to vector<2x4x32xf32>
    %89 = tpu.concatenate %88, %88, %88, %88, %88, %88, %88, %88 in 1 : vector<2x4x32xf32>, vector<2x4x32xf32>, vector<2x4x32xf32>, vector<2x4x32xf32>, vector<2x4x32xf32>, vector<2x4x32xf32>, vector<2x4x32xf32>, vector<2x4x32xf32> -> vector<2x32x32xf32>
    %90 = vector.shape_cast %11 : vector<32x32xf32> to vector<1x32x32xf32>
    %91 = vector.broadcast %90 : vector<1x32x32xf32> to vector<2x32x32xf32>
    %92 = arith.mulf %89, %91 : vector<2x32x32xf32>
    "tpu.trace_start"() <{level = 10 : i32, message = "bnd,bkd->bnk"}> : () -> ()
    %cst_28 = arith.constant dense<0.000000e+00> : vector<2x32x8xf32>
    %93 = tpu.matmul %92, %80, %cst_28 {dimension_numbers = #tpu.dot_dimension_numbers<[2], [2], [1], [1], [0, 0, 0, 1, 1, 1], [0], [0]>} : vector<2x32x32xf32>, vector<2x8x32xf32>, vector<2x32x8xf32> -> vector<2x32x8xf32>
    "tpu.trace_stop"() : () -> ()
    %cst_29 = arith.constant 5.000000e-01 : f32
    %94 = vector.broadcast %cst_29 : f32 to vector<2x32x8xf32>
    %95 = arith.mulf %93, %94 : vector<2x32x8xf32>
    %cst_30 = arith.constant dense<0xFF800000> : vector<2x32xf32>
    %96 = vector.multi_reduction <maximumf>, %95, %cst_30 [2] : vector<2x32x8xf32> to vector<2x32xf32>
    %97 = vector.shape_cast %96 : vector<2x32xf32> to vector<2x32x1xf32>
    %98 = vector.broadcast %97 : vector<2x32x1xf32> to vector<2x32x8xf32>
    %99 = arith.subf %95, %98 : vector<2x32x8xf32>
    %100 = math.exp %99 : vector<2x32x8xf32>
    %cst_31 = arith.constant dense<0.000000e+00> : vector<2x32xf32>
    %101 = vector.multi_reduction <add>, %100, %cst_31 [2] : vector<2x32x8xf32> to vector<2x32xf32>
    %102 = vector.shape_cast %101 : vector<2x32xf32> to vector<2x32x1xf32>
    %103 = vector.broadcast %102 : vector<2x32x1xf32> to vector<2x32x8xf32>
    %104 = arith.divf %100, %103 : vector<2x32x8xf32>
    "tpu.trace_start"() <{level = 10 : i32, message = "bnk,bkd->bnd"}> : () -> ()
    %cst_32 = arith.constant dense<0.000000e+00> : vector<2x32x32xf32>
    %105 = tpu.matmul %104, %82, %cst_32 {dimension_numbers = #tpu.dot_dimension_numbers<[2], [1], [1], [2], [0, 0, 0, 1, 1, 2], [0], [0]>} : vector<2x32x8xf32>, vector<2x8x32xf32>, vector<2x32x32xf32> -> vector<2x32x32xf32>
    "tpu.trace_stop"() : () -> ()
    %106 = vector.shape_cast %11 : vector<32x32xf32> to vector<1x32x32xf32>
    %107 = vector.broadcast %106 : vector<1x32x32xf32> to vector<2x32x32xf32>
    %108 = arith.mulf %105, %107 : vector<2x32x32xf32>
    %109 = vector.shape_cast %108 : vector<2x32x32xf32> to vector<64x32xf32>
    %cst_33 = arith.constant dense<0.000000e+00> : vector<8x32xf32>
    %110 = tpu.matmul %12, %109, %cst_33 {dimension_numbers = #tpu.dot_dimension_numbers<[1], [0], [0], [1], [0, 0, 1, 1], [], []>} : vector<8x64xf32>, vector<64x32xf32>, vector<8x32xf32> -> vector<8x32xf32>
    %cst_34 = arith.constant dense<0.000000e+00> : vector<8x32xf32>
    %111 = tpu.matmul %110, %10, %cst_34 {dimension_numbers = #tpu.dot_dimension_numbers<[1], [0], [0], [1], [0, 0, 1, 1], [], []>} : vector<8x32xf32>, vector<32x32xf32>, vector<8x32xf32> -> vector<8x32xf32>
    %112 = vector.broadcast %6 : vector<1x32xf32> to vector<8x32xf32>
    %113 = arith.addf %111, %112 : vector<8x32xf32>
    %114 = arith.truncf %113 : vector<8x32xf32> to vector<8x32xbf16>
    %c0_35 = arith.constant 0 : index
    %c0_36 = arith.constant 0 : index
    %115 = vector.load %arg3[%c0_35, %c0_36] : memref<32x2048xbf16, #tpu.memory_space<vmem>>, vector<32x2048xbf16>
    %cst_37 = arith.constant dense<0.000000e+00> : vector<8x2048xf32>
    %116 = tpu.matmul %114, %115, %cst_37 {dimension_numbers = #tpu.dot_dimension_numbers<[1], [0], [0], [1], [0, 0, 1, 1], [], []>} : vector<8x32xbf16>, vector<32x2048xbf16>, vector<8x2048xf32> -> vector<8x2048xf32>
    %c0_38 = arith.constant 0 : index
    %c0_39 = arith.constant 0 : index
    %117 = vector.load %arg4[%c0_38, %c0_39] : memref<1x2048xf32, #tpu.memory_space<vmem>>, vector<1x2048xf32>
    %118 = vector.broadcast %117 : vector<1x2048xf32> to vector<8x2048xf32>
    %119 = arith.addf %116, %118 : vector<8x2048xf32>
    %c0_40 = arith.constant 0 : index
    %c0_41 = arith.constant 0 : index
    %120 = vector.load %arg5[%c0_40, %c0_41] : memref<8x2048xf32, #tpu.memory_space<vmem>>, vector<8x2048xf32>
    tpu.vector_store %arg5[%c0_40, %c0_41], %119 {strides = array<i32>} : memref<8x2048xf32, #tpu.memory_space<vmem>>, vector<8x2048xf32>,
    return
  }
  func.func @transform_0(%arg0: i32) -> (i32, i32) {
    %c0_i32 = arith.constant 0 : i32
    %c0_i32_0 = arith.constant 0 : i32
    %c0_i32_1 = arith.constant 0 : i32
    return %c0_i32, %c0_i32_0 : i32, i32
  }
  func.func @transform_1(%arg0: i32) -> (i32, i32) {
    %c0_i32 = arith.constant 0 : i32
    %c0_i32_0 = arith.constant 0 : i32
    %c0_i32_1 = arith.constant 0 : i32
    return %c0_i32, %c0_i32_0 : i32, i32
  }
  func.func @transform_2(%arg0: i32) -> (i32, i32) {
    %c0_i32 = arith.constant 0 : i32
    %c0_i32_0 = arith.constant 0 : i32
    return %c0_i32, %arg0 : i32, i32
  }
  func.func @transform_3(%arg0: i32) -> (i32, i32) {
    %c0_i32 = arith.constant 0 : i32
    %c0_i32_0 = arith.constant 0 : i32
    return %c0_i32, %arg0 : i32, i32
  }
  func.func @transform_4(%arg0: i32) -> (i32, i32) {
    %c0_i32 = arith.constant 0 : i32
    %c0_i32_0 = arith.constant 0 : i32
    return %c0_i32, %arg0 : i32, i32
  }
}

</mosaic_0001>

<llo_original>
// kernel: gene_memory_network_forward.1
$region0: #{gene_memory_network_forward.1}
  #allocation0 [shape = 'u32[]', space=smem, size = 0x4, offset = 0x4, fixed_abs, tag = 'smem constant byte address 0x4 - core index']
  #allocation1 [shape = 'u32[144,128]{1,0:T(1,128)}', space=vmem, size = 0x12000, scoped, tag = 'internal scratch']
  %s0 = inlined_call_operand.vmem [shape: f32[8,4096], index: 0, kind: input, shape index: {}]
  %s1 = inlined_call_operand.vmem [shape: f32[120,128], index: 1, kind: input, shape index: {}]
  %s2 = inlined_call_operand.vmem [shape: bf16[32,4096], index: 2, kind: input, shape index: {}]
  %s3 = inlined_call_operand.vmem [shape: f32[1,4096], index: 3, kind: input, shape index: {}]
  %s4 = inlined_call_operand.vmem [shape: f32[8,4096], index: 4, kind: output, shape index: {}]
  %s5 = sld [smem:[#allocation0]]
  $region72: #{gene_memory_network_forward.1} parent=0
    _
  %s7 = ssub.s32 1, %s5
  %s8 = scalar_select 0, %s7, %s5
  $region1: #{gene_memory_network_forward.1} parent=0
    #allocation2 [shape = 'u8[262144]{0}', space=vmem, size = 0x40000, scoped, tag = 'input window, operand 2']
    loop: start=0, step=1, limit=4
    $region2: #{gene_memory_network_forward.1} parent=1 // loop_pre_header
      _
    $region3: #{gene_memory_network_forward.1} parent=1 // loop_header
      %s10 = sphi 0, %s14
      %p11 = scmp.ge.s32.totalorder %s10, 4
      %s18 = sphi 0, %s18
      %s20 = sphi 0, %s18
      %s21 = sphi 0, %s20
      %s35 = sphi 0, %s21
      %s39 = sphi 0, %s39
      %s41 = sphi 0, %s39
      %s42 = sphi 0, %s41
      %s56 = sphi 0, %s42
      %s62 = sphi 0, %s64
      %s65 = sphi 0, %s62
      %s66 = sphi 0, %s65
      %s82 = sphi 0, %s66
      %s88 = sphi 0, %s90
      %s91 = sphi 0, %s88
      %s92 = sphi 0, %s91
      %s108 = sphi 0, %s92
      %s114 = sphi 0, %s116
      %s117 = sphi 0, %s114
      %s118 = sphi 0, %s117
      %s134 = sphi 0, %s118
    $region4: #{gene_memory_network_forward.1} parent=1 // loop_header_branch
      %13 = sbr.rel (%p11) target = $region8
    $region5: #{gene_memory_network_forward.1} parent=1 // loop_body
      %s15 = ssub.s32 %s10, 1
      %s16 = ssub.s32 %s10, 2
      %s17 = sadd.s32 %s10, 1
      %s19 = sadd.s32 %s18, 1
      %p22 = scmp.eq.s32.totalorder %s10, 1
      %p23 = scmp.ne.s32.totalorder %s18, %s20
      %p24 = scmp.eq.s32.totalorder %s10, 0
      %p25 = por %p23, %p24
      %p26 = scmp.ne.s32.totalorder %s18, %s20
      %p27 = scmp.eq.s32.totalorder %s15, 1
      %p28 = por %p26, %p27
      %p29 = scmp.ne.s32.totalorder %s20, %s21
      %p30 = scmp.eq.s32.totalorder %s15, 0
      %p31 = por %p29, %p30
      %p32 = scmp.ne.s32.totalorder %s20, %s21
      %p33 = scmp.eq.s32.totalorder %s16, 1
      %p34 = por %p32, %p33
      %p36 = scmp.ne.s32.totalorder %s21, %s35
      %p37 = scmp.eq.s32.totalorder %s16, 0
      %p38 = por %p36, %p37
      %s40 = sadd.s32 %s39, 1
      %p43 = scmp.eq.s32.totalorder %s10, 1
      %p44 = scmp.ne.s32.totalorder %s39, %s41
      %p45 = scmp.eq.s32.totalorder %s10, 0
      %p46 = por %p44, %p45
      %p47 = scmp.ne.s32.totalorder %s39, %s41
      %p48 = scmp.eq.s32.totalorder %s15, 1
      %p49 = por %p47, %p48
      %p50 = scmp.ne.s32.totalorder %s41, %s42
      %p51 = scmp.eq.s32.totalorder %s15, 0
      %p52 = por %p50, %p51
      %p53 = scmp.ne.s32.totalorder %s41, %s42
      %p54 = scmp.eq.s32.totalorder %s16, 1
      %p55 = por %p53, %p54
      %p57 = scmp.ne.s32.totalorder %s42, %s56
      %p58 = scmp.eq.s32.totalorder %s16, 0
      %p59 = por %p57, %p58
      %s60 = ssub.s32 %s10, %s17
      %p61 = scmp.eq.s32.totalorder %s60, 0
      %s63 = sadd.s32 %s62, 1
      %s64 = scalar_select %p61, %s62, %s63
      %p67 = pneg %p61
      %p68 = scmp.eq.s32.totalorder %s10, 1
      %p69 = por %p67, %p68
      %p70 = scmp.ne.s32.totalorder %s62, %s65
      %p71 = scmp.eq.s32.totalorder %s10, 0
      %p72 = por %p70, %p71
      %p73 = scmp.ne.s32.totalorder %s62, %s65
      %p74 = scmp.eq.s32.totalorder %s15, 1
      %p75 = por %p73, %p74
      %p76 = scmp.ne.s32.totalorder %s65, %s66
      %p77 = scmp.eq.s32.totalorder %s15, 0
      %p78 = por %p76, %p77
      %p79 = scmp.ne.s32.totalorder %s65, %s66
      %p80 = scmp.eq.s32.totalorder %s16, 1
      %p81 = por %p79, %p80
      %p83 = scmp.ne.s32.totalorder %s66, %s82
      %p84 = scmp.eq.s32.totalorder %s16, 0
      %p85 = por %p83, %p84
      %s86 = ssub.s32 %s10, %s17
      %p87 = scmp.eq.s32.totalorder %s86, 0
      %s89 = sadd.s32 %s88, 1
      %s90 = scalar_select %p87, %s88, %s89
      %p93 = pneg %p87
      %p94 = scmp.eq.s32.totalorder %s10, 1
      %p95 = por %p93, %p94
      %p96 = scmp.ne.s32.totalorder %s88, %s91
      %p97 = scmp.eq.s32.totalorder %s10, 0
      %p98 = por %p96, %p97
      %p99 = scmp.ne.s32.totalorder %s88, %s91
      %p100 = scmp.eq.s32.totalorder %s15, 1
      %p101 = por %p99, %p100
      %p102 = scmp.ne.s32.totalorder %s91, %s92
      %p103 = scmp.eq.s32.totalorder %s15, 0
      %p104 = por %p102, %p103
      %p105 = scmp.ne.s32.totalorder %s91, %s92
      %p106 = scmp.eq.s32.totalorder %s16, 1
      %p107 = por %p105, %p106
      %p109 = scmp.ne.s32.totalorder %s92, %s108
      %p110 = scmp.eq.s32.totalorder %s16, 0
      %p111 = por %p109, %p110
      %s112 = ssub.s32 %s10, %s17
      %p113 = scmp.eq.s32.totalorder %s112, 0
      %s115 = sadd.s32 %s114, 1
      %s116 = scalar_select %p113, %s114, %s115
      %p119 = pneg %p113
      %p120 = scmp.eq.s32.totalorder %s10, 1
      %p121 = por %p119, %p120
      %p122 = scmp.ne.s32.totalorder %s114, %s117
      %p123 = scmp.eq.s32.totalorder %s10, 0
      %p124 = por %p122, %p123
      %p125 = scmp.ne.s32.totalorder %s114, %s117
      %p126 = scmp.eq.s32.totalorder %s15, 1
      %p127 = por %p125, %p126
      %p128 = scmp.ne.s32.totalorder %s117, %s118
      %p129 = scmp.eq.s32.totalorder %s15, 0
      %p130 = por %p128, %p129
      %p131 = scmp.ne.s32.totalorder %s117, %s118
      %p132 = scmp.eq.s32.totalorder %s16, 1
      %p133 = por %p131, %p132
      %p135 = scmp.ne.s32.totalorder %s118, %s134
      %p136 = scmp.eq.s32.totalorder %s16, 0
      %p137 = por %p135, %p136
      %p138 = scmp.le.s32.totalorder 1, %s10
      %p139 = scmp.lt.s32.totalorder %s10, 3
      %p140 = pnand %p138, %p139
      %p141 = pneg %p140
      // Predicated region
      $region9: #{gene_memory_network_forward.1} parent=5 // pred_check
        _
      $region10: #{gene_memory_network_forward.1} parent=5 // pred_check_branch
        %143 = sbr.rel (%p140) target = $region12
      $region11: #{gene_memory_network_forward.1} parent=5 // pred_region
        %s144 = ssub.s32 %s10, 1
        // Predicated region
        $region13: #{gene_memory_network_forward.1} parent=11 // pred_check
          %p145 = pneg %p31
        $region14: #{gene_memory_network_forward.1} parent=11 // pred_check_branch
          %147 = sbr.rel (%p145) target = $region16
        $region15: #{gene_memory_network_forward.1} parent=11 // pred_region
          _
        $region16: #{gene_memory_network_forward.1} parent=11 // pred_fallthru
          _
        // Predicated region
        $region17: #{gene_memory_network_forward.1} parent=11 // pred_check
          %p148 = pneg %p52
        $region18: #{gene_memory_network_forward.1} parent=11 // pred_check_branch
          %150 = sbr.rel (%p148) target = $region20
        $region19: #{gene_memory_network_forward.1} parent=11 // pred_region
          _
        $region20: #{gene_memory_network_forward.1} parent=11 // pred_fallthru
          _
      $region12: #{gene_memory_network_forward.1} parent=5 // pred_fallthru
        _
      %p151 = scmp.lt.s32.totalorder %s10, 2
      // Predicated region
      $region21: #{gene_memory_network_forward.1} parent=5 // pred_check
        %p152 = pneg %p151
      $region22: #{gene_memory_network_forward.1} parent=5 // pred_check_branch
        %154 = sbr.rel (%p152) target = $region24
      $region23: #{gene_memory_network_forward.1} parent=5 // pred_region
        // Predicated region
        $region25: #{gene_memory_network_forward.1} parent=23 // pred_check
          %p155 = pneg %p72
        $region26: #{gene_memory_network_forward.1} parent=23 // pred_check_branch
          %157 = sbr.rel (%p155) target = $region28
        $region27: #{gene_memory_network_forward.1} parent=23 // pred_region
          %s158 = sand.u32 %s62, 1
          %s159 = sand.u32 %s62, 1
          %s160 = smul.addr %s159, 256
          %s161 = scalar_lea.vmem [#allocation2], %s160
          %s162 = smul.u32 16, %s10
          %s163 = smul.addr %s162, 4
          %s164 = scalar_lea.vmem %s2, %s163
          // Predicated region
          $region29: #{gene_memory_network_forward.1} parent=27 // pred_check
            _
          $region30: #{gene_memory_network_forward.1} parent=27 // pred_check_branch
            %166 = sbr.rel (0) target = $region32
          $region31: #{gene_memory_network_forward.1} parent=27 // pred_region
            // Predicated region
            $region33: #{gene_memory_network_forward.1} parent=31 // pred_check
              _
            $region34: #{gene_memory_network_forward.1} parent=31 // pred_check_branch
              %168 = sbr.rel (0) target = $region36
            $region35: #{gene_memory_network_forward.1} parent=31 // pred_region
              loop: start=0, step=1, limit=1
              $region37: #{gene_memory_network_forward.1} parent=35 // loop_pre_header
                _
              $region38: #{gene_memory_network_forward.1} parent=35 // loop_header
                %s170 = sphi 0, %s174
                %p171 = scmp.ge.s32.totalorder %s170, 1
                %s175 = sphi %s164, %s164
                %s176 = sphi %s161, %s161
              $region39: #{gene_memory_network_forward.1} parent=35 // loop_header_branch
                %173 = sbr.rel (%p171) target = $region43
              $region40: #{gene_memory_network_forward.1} parent=35 // loop_body
                %v177 = vld [vmem:[%s175] sm:$0xff]
                %178 = vst [vmem:[%s176] sm:$0xff] %v177
                %v179 = vld [vmem:[%s175 + $0x8] sm:$0xff]
                %180 = vst [vmem:[%s176 + $0x8] sm:$0xff] %v179
                %v181 = vld [vmem:[%s175 + $0x10] sm:$0xff]
                %182 = vst [vmem:[%s176 + $0x10] sm:$0xff] %v181
                %v183 = vld [vmem:[%s175 + $0x18] sm:$0xff]
                %184 = vst [vmem:[%s176 + $0x18] sm:$0xff] %v183
                %v185 = vld [vmem:[%s175 + $0x20] sm:$0xff]
                %186 = vst [vmem:[%s176 + $0x20] sm:$0xff] %v185
                %v187 = vld [vmem:[%s175 + $0x28] sm:$0xff]
                %188 = vst [vmem:[%s176 + $0x28] sm:$0xff] %v187
                %v189 = vld [vmem:[%s175 + $0x30] sm:$0xff]
                %190 = vst [vmem:[%s176 + $0x30] sm:$0xff] %v189
                %v191 = vld [vmem:[%s175 + $0x38] sm:$0xff]
                %192 = vst [vmem:[%s176 + $0x38] sm:$0xff] %v191
                %v193 = vld [vmem:[%s175 + $0x80] sm:$0xff]
                %194 = vst [vmem:[%s176 + $0x40] sm:$0xff] %v193
                %v195 = vld [vmem:[%s175 + $0x88] sm:$0xff]
                %196 = vst [vmem:[%s176 + $0x48] sm:$0xff] %v195
                %v197 = vld [vmem:[%s175 + $0x90] sm:$0xff]
                %198 = vst [vmem:[%s176 + $0x50] sm:$0xff] %v197
                %v199 = vld [vmem:[%s175 + $0x98] sm:$0xff]
                %200 = vst [vmem:[%s176 + $0x58] sm:$0xff] %v199
                %v201 = vld [vmem:[%s175 + $0xa0] sm:$0xff]
                %202 = vst [vmem:[%s176 + $0x60] sm:$0xff] %v201
                %v203 = vld [vmem:[%s175 + $0xa8] sm:$0xff]
                %204 = vst [vmem:[%s176 + $0x68] sm:$0xff] %v203
                %v205 = vld [vmem:[%s175 + $0xb0] sm:$0xff]
                %206 = vst [vmem:[%s176 + $0x70] sm:$0xff] %v205
                %v207 = vld [vmem:[%s175 + $0xb8] sm:$0xff]
                %208 = vst [vmem:[%s176 + $0x78] sm:$0xff] %v207
                %v209 = vld [vmem:[%s175 + $0x100] sm:$0xff]
                %210 = vst [vmem:[%s176 + $0x80] sm:$0xff] %v209
                %v211 = vld [vmem:[%s175 + $0x108] sm:$0xff]
                %212 = vst [vmem:[%s176 + $0x88] sm:$0xff] %v211
                %v213 = vld [vmem:[%s175 + $0x110] sm:$0xff]
                %214 = vst [vmem:[%s176 + $0x90] sm:$0xff] %v213
                %v215 = vld [vmem:[%s175 + $0x118] sm:$0xff]
                %216 = vst [vmem:[%s176 + $0x98] sm:$0xff] %v215
                %v217 = vld [vmem:[%s175 + $0x120] sm:$0xff]
                %218 = vst [vmem:[%s176 + $0xa0] sm:$0xff] %v217
                %v219 = vld [vmem:[%s175 + $0x128] sm:$0xff]
                %220 = vst [vmem:[%s176 + $0xa8] sm:$0xff] %v219
                %v221 = vld [vmem:[%s175 + $0x130] sm:$0xff]
                %222 = vst [vmem:[%s176 + $0xb0] sm:$0xff] %v221
                %v223 = vld [vmem:[%s175 + $0x138] sm:$0xff]
                %224 = vst [vmem:[%s176 + $0xb8] sm:$0xff] %v223
                %v225 = vld [vmem:[%s175 + $0x180] sm:$0xff]
                %226 = vst [vmem:[%s176 + $0xc0] sm:$0xff] %v225
                %v227 = vld [vmem:[%s175 + $0x188] sm:$0xff]
                %228 = vst [vmem:[%s176 + $0xc8] sm:$0xff] %v227
                %v229 = vld [vmem:[%s175 + $0x190] sm:$0xff]
                %230 = vst [vmem:[%s176 + $0xd0] sm:$0xff] %v229
                %v231 = vld [vmem:[%s175 + $0x198] sm:$0xff]
                %232 = vst [vmem:[%s176 + $0xd8] sm:$0xff] %v231
                %v233 = vld [vmem:[%s175 + $0x1a0] sm:$0xff]
                %234 = vst [vmem:[%s176 + $0xe0] sm:$0xff] %v233
                %v235 = vld [vmem:[%s175 + $0x1a8] sm:$0xff]
                %236 = vst [vmem:[%s176 + $0xe8] sm:$0xff] %v235
                %v237 = vld [vmem:[%s175 + $0x1b0] sm:$0xff]
                %238 = vst [vmem:[%s176 + $0xf0] sm:$0xff] %v237
                %v239 = vld [vmem:[%s175 + $0x1b8] sm:$0xff]
                %240 = vst [vmem:[%s176 + $0xf8] sm:$0xff] %v239
              $region41: #{gene_memory_network_forward.1} parent=35 // loop_footer
                %s174 = sadd.s32 1, %s170
              $region42: #{gene_memory_network_forward.1} parent=35 // loop_footer_branch
                %169 = sbr.rel target = $region38
              $region43: #{gene_memory_network_forward.1} parent=35 // loop_exit
                _
            $region36: #{gene_memory_network_forward.1} parent=31 // pred_fallthru
              _
            // Predicated region
            $region44: #{gene_memory_network_forward.1} parent=31 // pred_check
              _
            $region45: #{gene_memory_network_forward.1} parent=31 // pred_check_branch
              %242 = sbr.rel target = $region47
            $region46: #{gene_memory_network_forward.1} parent=31 // pred_region
              _
            $region47: #{gene_memory_network_forward.1} parent=31 // pred_fallthru
              _
          $region32: #{gene_memory_network_forward.1} parent=27 // pred_fallthru
            _
          %243 = vnop
        $region28: #{gene_memory_network_forward.1} parent=23 // pred_fallthru
          _
        // Predicated region
        $region48: #{gene_memory_network_forward.1} parent=23 // pred_check
          %p244 = pneg %p98
        $region49: #{gene_memory_network_forward.1} parent=23 // pred_check_branch
          %246 = sbr.rel (%p244) target = $region51
        $region50: #{gene_memory_network_forward.1} parent=23 // pred_region
          %s247 = smul.u32 16, %s10
          %p248 = scmp.lt.s32.totalorder %s247, 31
          %s249 = scalar_select %p248, %s247, 31
          %s250 = scalar_lea.vmem %s3, %s249
          %s251 = smul.u32 16, %s10
        $region51: #{gene_memory_network_forward.1} parent=23 // pred_fallthru
          _
      $region24: #{gene_memory_network_forward.1} parent=5 // pred_fallthru
        _
      %p252 = scmp.le.s32.totalorder 1, %s10
      %p253 = scmp.lt.s32.totalorder %s10, 3
      %p254 = pnand %p252, %p253
      %p255 = pneg %p254
      // Predicated region
      $region52: #{gene_memory_network_forward.1} parent=5 // pred_check
        _
      $region53: #{gene_memory_network_forward.1} parent=5 // pred_check_branch
        %257 = sbr.rel (%p254) target = $region55
      $region54: #{gene_memory_network_forward.1} parent=5 // pred_region
        %s258 = ssub.s32 %s10, 1
        %s259 = sand.u32 %s65, 1
        %s260 = sand.u32 %s65, 1
        %s261 = smul.addr %s260, 256
        %s262 = scalar_lea.vmem [#allocation2], %s261
        // Predicated region
        $region56: #{gene_memory_network_forward.1} parent=54 // pred_check
          %p263 = pneg %p78
        $region57: #{gene_memory_network_forward.1} parent=54 // pred_check_branch
          %265 = sbr.rel (%p263) target = $region59
        $region58: #{gene_memory_network_forward.1} parent=54 // pred_region
          _
        $region59: #{gene_memory_network_forward.1} parent=54 // pred_fallthru
          _
        %p266 = pneg %p31
        %p267 = pneg %p28
        %p268 = pneg %p52
        %p269 = pneg %p49
        %s270 = sand.u32 %s65, 1
        %s271 = sand.u32 %s65, 1
        %s272 = smul.addr %s271, 256
        %s273 = scalar_lea.vmem [#allocation2], %s272
        %p274 = pneg %p78
        %p275 = pneg %p75
        %s276 = smul.u32 16, %s15
        %p277 = scmp.lt.s32.totalorder %s276, 31
        %s278 = scalar_select %p277, %s276, 31
        %s279 = scalar_lea.vmem %s3, %s278
        %p280 = pneg %p104
        %p281 = pneg %p101
        %p282 = pneg %p130
        %p283 = pneg %p127
        %s284 = smul.u32 16, %s15
        %p285 = scmp.lt.s32.totalorder %s284, 31
        %s286 = scalar_select %p285, %s284, 31
        %s287 = smul.addr %s286, 8
        %s288 = scalar_lea.vmem %s4, %s287
        %s289 = smul.u32 16, %s15
        %s290 = smul.u32 16, %s15
        %p291 = scmp.lt.s32.totalorder %s290, 31
        %s292 = scalar_select %p291, %s290, 31
        %s293 = scalar_lea.vmem %s3, %s292
        %s294 = smul.u32 16, %s15
        %s295 = smul.u32 16, %s15
        %p296 = scmp.lt.s32.totalorder %s295, 31
        %s297 = scalar_select %p296, %s295, 31
        %s298 = smul.addr %s297, 8
        %s299 = scalar_lea.vmem %s4, %s298
        %s300 = smul.u32 16, %s15
        %v302 = vld [vmem:[%s1] sm:$0x1]
        %v303 = vld [vmem:[%s1 + $0x1] sm:$0x1]
        %v304 = vld [vmem:[%s1 + $0x2] sm:$0x1]
        %v305 = vld [vmem:[%s1 + $0x3] sm:$0x1]
        %v306 = vld [vmem:[%s1 + $0x4] sm:$0x1]
        %v307 = vld [vmem:[%s1 + $0x5] sm:$0x1]
        %v308 = vld [vmem:[%s1 + $0x6] sm:$0x1]
        %v309 = vld [vmem:[%s1 + $0x7] sm:$0x1]
        %v310 = vld [vmem:[%s1 + $0x8] sm:$0x1]
        %v311 = vld [vmem:[%s1 + $0x10] sm:$0xff]
        %v312 = vld [vmem:[%s1 + $0x18] sm:$0xff]
        %v313 = vld [vmem:[%s1 + $0x20] sm:$0xff]
        %v314 = vld [vmem:[%s1 + $0x28] sm:$0xff]
        %v315 = vld [vmem:[%s1 + $0x30] sm:$0xff]
        %v316 = vld [vmem:[%s1 + $0x38] sm:$0xff]
        %v317 = vld [vmem:[%s1 + $0x40] sm:$0xff]
        %v318 = vld [vmem:[%s1 + $0x48] sm:$0xff]
        %v319 = vld [vmem:[%s1 + $0x50] sm:$0xff]
        %v320 = vld [vmem:[%s1 + $0x58] sm:$0xff]
        %v321 = vld [vmem:[%s1 + $0x60] sm:$0xff]
        %v322 = vld [vmem:[%s1 + $0x68] sm:$0xff]
        %v323 = vld [vmem:[%s1 + $0x70] sm:$0xff]
        %v324 = vld [vmem:[%s0] sm:$0xff]
        %v325 = vld [vmem:[%s0 + $0x8] sm:$0xff]
        %v326 = vld [vmem:[%s0 + $0x10] sm:$0xff]
        %v327 = vld [vmem:[%s0 + $0x18] sm:$0xff]
        %v328 = vld [vmem:[%s0 + $0x20] sm:$0xff]
        %v329 = vld [vmem:[%s0 + $0x28] sm:$0xff]
        %v330 = vld [vmem:[%s0 + $0x30] sm:$0xff]
        %v331 = vld [vmem:[%s0 + $0x38] sm:$0xff]
        %v332 = vld [vmem:[%s0 + $0x40] sm:$0xff]
        %v333 = vld [vmem:[%s0 + $0x48] sm:$0xff]
        %v334 = vld [vmem:[%s0 + $0x50] sm:$0xff]
        %v335 = vld [vmem:[%s0 + $0x58] sm:$0xff]
        %v336 = vld [vmem:[%s0 + $0x60] sm:$0xff]
        %v337 = vld [vmem:[%s0 + $0x68] sm:$0xff]
        %v338 = vld [vmem:[%s0 + $0x70] sm:$0xff]
        %v339 = vld [vmem:[%s0 + $0x78] sm:$0xff]
        %v340 = vld [vmem:[%s0 + $0x80] sm:$0xff]
        %v341 = vld [vmem:[%s0 + $0x88] sm:$0xff]
        %v342 = vld [vmem:[%s0 + $0x90] sm:$0xff]
        %v343 = vld [vmem:[%s0 + $0x98] sm:$0xff]
        %v344 = vld [vmem:[%s0 + $0xa0] sm:$0xff]
        %v345 = vld [vmem:[%s0 + $0xa8] sm:$0xff]
        %v346 = vld [vmem:[%s0 + $0xb0] sm:$0xff]
        %v347 = vld [vmem:[%s0 + $0xb8] sm:$0xff]
        %v348 = vld [vmem:[%s0 + $0xc0] sm:$0xff]
        %v349 = vld [vmem:[%s0 + $0xc8] sm:$0xff]
        %v350 = vld [vmem:[%s0 + $0xd0] sm:$0xff]
        %v351 = vld [vmem:[%s0 + $0xd8] sm:$0xff]
        %v352 = vld [vmem:[%s0 + $0xe0] sm:$0xff]
        %v353 = vld [vmem:[%s0 + $0xe8] sm:$0xff]
        %v354 = vld [vmem:[%s0 + $0xf0] sm:$0xff]
        %v355 = vld [vmem:[%s0 + $0xf8] sm:$0xff]
        %v356 = vadd.f32 %v324, %v325
        %v357 = vadd.f32 %v356, %v326
        %v358 = vadd.f32 %v357, %v327
        %v359 = vadd.f32 %v358, %v328
        %v360 = vadd.f32 %v359, %v329
        %v361 = vadd.f32 %v360, %v330
        %v362 = vadd.f32 %v361, %v331
        %v363 = vadd.f32 %v362, %v332
        %v364 = vadd.f32 %v363, %v333
        %v365 = vadd.f32 %v364, %v334
        %v366 = vadd.f32 %v365, %v335
        %v367 = vadd.f32 %v366, %v336
        %v368 = vadd.f32 %v367, %v337
        %v369 = vadd.f32 %v368, %v338
        %v370 = vadd.f32 %v369, %v339
        %v371 = vadd.f32 %v370, %v340
        %v372 = vadd.f32 %v371, %v341
        %v373 = vadd.f32 %v372, %v342
        %v374 = vadd.f32 %v373, %v343
        %v375 = vadd.f32 %v374, %v344
        %v376 = vadd.f32 %v375, %v345
        %v377 = vadd.f32 %v376, %v346
        %v378 = vadd.f32 %v377, %v347
        %v379 = vadd.f32 %v378, %v348
        %v380 = vadd.f32 %v379, %v349
        %v381 = vadd.f32 %v380, %v350
        %v382 = vadd.f32 %v381, %v351
        %v383 = vadd.f32 %v382, %v352
        %v384 = vadd.f32 %v383, %v353
        %v385 = vadd.f32 %v384, %v354
        %v386 = vadd.f32 %v385, %v355
        %387 = vadd.xlane.f32.xlu0 %v386
        %v388 = vpop.xlane.xlu0 %387
        %v389 = vrcp.pop 4096.0
        %v390 = vmul.f32 %v388, %v389
        %vm391 = vcmask 7168
        %v392 = vsel %vm391, %v390, 0.0
        %393 = vadd.xlane.f32.xlu0 %v392
        %v394 = vpop.xlane.xlu0 %393
        %v395 = vrot.slane %v394, 4
        %v396 = vadd.f32 %v394, %v395
        %v397 = vrot.slane %v396, 2
        %v398 = vadd.f32 %v396, %v397
        %v399 = vrot.slane %v398, 1
        %v400 = vadd.f32 %v398, %v399
        %s401 = vtos %v400
        %v402 = vstv %s401
        %v403 = vrcp.pop 8.0
        %v404 = vmul.f32 %v402, %v403
        %v405 = vmul.f32 %v404, %v303
        %v406 = vadd.f32 %v405, %v304
        %v407 = vmul.f32 %v302, 32.0
        %vm408 = vcmask 253952
        %v409 = vsel %vm408, %v406, 0.0
        %410 = vadd.xlane.f32.xlu0 %v409
        %v411 = vpop.xlane.xlu0 %410
        %v412 = vadd.f32 %v407, %v411
        %v413 = vlaneseq
        %v414 = vshrl.u32 %v413, 7
        %v415 = vsub.s32 0, %v414
        %v416 = vrot.slane %v412, %v415
        %v417 = vmul.f32 %v390, %v416
        %vm418 = vcmp.ge.f32.partialorder %v390, 0.0
        %v419 = vsel %vm418, 1, 0
        %v420 = vcvt.s32.f32 %v419
        %v421 = vlaneseq
        %v422 = vshrl.u32 %v421, 7
        %v423 = vsub.s32 0, %v422
        %v424 = vrot.slane %v309, %v423
        %v425 = vmul.f32 %v420, %v424
        %v426 = vsub.f32 1.0, %v420
        %v427 = vlaneseq
        %v428 = vshrl.u32 %v427, 7
        %v429 = vsub.s32 0, %v428
        %v430 = vrot.slane %v310, %v429
        %v431 = vmul.f32 %v426, %v430
        %v432 = vadd.f32 %v425, %v431
        %vm433 = vcmp.gt.f32.partialorder %v432, 0.5
        %v434 = vsel %vm433, %v417, -1e+30
        %vm435 = vcmask 326656
        %v436 = vsel %vm435, %v434, -inf
        %437 = vmax.xlane.f32.xlu0 %v436
        %v438 = vpop.xlane.xlu0 %437
        %v439 = vsub.f32 %v434, %v438
        %v440 = vmul.f32 %v439, 1.442695
        %v441 = vpow.pop %v440
        %v442 = vsel %vm435, %v441, 0.0
        %443 = vadd.xlane.f32.xlu0 %v442
        %v444 = vpop.xlane.xlu0 %443
        %v445 = vrcp.pop %v444
        %v446 = vmul.f32 %v441, %v445
        %v447 = vlaneseq
        %v448 = vshrl.u32 %v447, 7
        %v449 = vsub.s32 0, %v448
        %v450 = vrot.slane %v302, %v449
        %v451 = vmul.f32 %v446, %v450
        %v452 = vsel %vm435, %v451, 0.0
        %453 = vadd.xlane.f32.xlu0 %v452
        %v454 = vpop.xlane.xlu0 %453
        %v455 = vlaneseq
        %v456 = vshrl.u32 %v455, 7
        %v457 = vsub.s32 0, %v456
        %v458 = vrot.slane %v406, %v457
        %v459 = vadd.f32 %v454, %v458
        %v462 = vunpack.c.l.s4 839922192
        %v463 = vunpack.c.0.s8 %v462
        %v464 = vlaneseq
        %v465 = vshrl.u32 %v464, 7
        %v466 = vsub.s32 %v463, %v465
        %v467 = vrot.slane %v390, %v466
        %v469 = vunpack.c.l.s4 1985246804
        %v470 = vunpack.c.0.s8 %v469
        %v471 = vlaneseq
        %v472 = vshrl.u32 %v471, 7
        %v473 = vsub.s32 %v470, %v472
        %v474 = vrot.slane %v390, %v473
        %v478 = vcombine.high %v459, %v459
        %v479 = vcombine.low %v459, %v459
        %v480 = vcombine.low %v478, %v478
        %vm483 = vcmask 1043456
        %v484 = vsel %vm483, %v467, %v479
        %v485 = vsel %vm483, %v474, %v480
        %v486 = vlaneseq
        %v487 = vshrl.u32 %v486, 7
        %v488 = vsub.s32 0, %v487
        %v489 = vrot.slane %v307, %v488
        %vm490 = vcmask 261120
        %v492 = vsel %vm490, %v484, 0
        %v495 = vsel %vm490, %v485, 0
        %497 = vmatprep.subr.mxu0 0.0
        %498 = vmatpush1.msra.mxu0 %v311
        %499 = vmatprep.subr.mxu0 0.0
        %500 = vmatpush1.msra.mxu0 %v312
        %501 = vmatprep.subr.mxu0 0.0
        %502 = vmatpush1.msra.mxu0 %v313
        %503 = vmatprep.subr.mxu0 0.0
        %504 = vmatpush1.msra.mxu0 %v314
        %505 = vmatprep.subr.mxu0 0.0
        %506 = vmatpush1.msra.mxu0 0.0
        %507 = vmatprep.subr.mxu0 0.0
        %508 = vmatpush1.msra.mxu0 0.0
        %509 = vmatprep.subr.mxu0 0.0
        %510 = vmatpush1.msra.mxu0 0.0
        %511 = vmatprep.subr.mxu0 0.0
        %512 = vmatpush1.msra.mxu0 0.0
        %513 = vmatprep.subr.mxu0 0.0
        %514 = vmatpush1.msra.mxu0 0.0
        %515 = vmatprep.subr.mxu0 0.0
        %516 = vmatpush1.msra.mxu0 0.0
        %517 = vmatprep.subr.mxu0 0.0
        %518 = vmatpush1.msra.mxu0 0.0
        %519 = vmatprep.subr.mxu0 0.0
        %520 = vmatpush1.msra.mxu0 0.0
        %521 = vmatprep.subr.mxu0 0.0
        %522 = vmatpush1.msra.mxu0 0.0
        %523 = vmatprep.subr.mxu0 0.0
        %524 = vmatpush1.msra.mxu0 0.0
        %525 = vmatprep.subr.mxu0 0.0
        %526 = vmatpush1.msra.mxu0 0.0
        %527 = vmatprep.subr.mxu0 0.0
        %528 = vmatpush1.msra.mxu0 0.0
        %529 = vmatprep.subr.mxu0 0.0
        %530 = vmatpush1.msra.mxu0 0.0
        %531 = vmatprep.subr.mxu0 0.0
        %532 = vmatpush1.msra.mxu0 0.0
        %533 = vmatprep.subr.mxu0 0.0
        %534 = vmatpush1.msra.mxu0 0.0
        %535 = vmatprep.subr.mxu0 0.0
        %536 = vmatpush1.msra.mxu0 0.0
        %537 = vmatprep.subr.mxu0 0.0
        %538 = vmatpush1.msra.mxu0 0.0
        %539 = vmatprep.subr.mxu0 0.0
        %540 = vmatpush1.msra.mxu0 0.0
        %541 = vmatprep.subr.mxu0 0.0
        %542 = vmatpush1.msra.mxu0 0.0
        %543 = vmatprep.subr.mxu0 0.0
        %544 = vmatpush1.msra.mxu0 0.0
        %545 = vmatprep.subr.mxu0 0.0
        %546 = vmatpush1.msra.mxu0 0.0
        %547 = vmatprep.subr.mxu0 0.0
        %548 = vmatpush1.msra.mxu0 0.0
        %549 = vmatprep.subr.mxu0 0.0
        %550 = vmatpush1.msra.mxu0 0.0
        %551 = vmatprep.subr.mxu0 0.0
        %552 = vmatpush1.msra.mxu0 0.0
        %553 = vmatprep.subr.mxu0 0.0
        %554 = vmatpush1.msra.mxu0 0.0
        %555 = vmatprep.subr.mxu0 0.0
        %556 = vmatpush1.msra.mxu0 0.0
        %557 = vmatprep.subr.mxu0 0.0
        %558 = vmatpush1.msra.mxu0 0.0
        %559 = vmatprep.subr.mxu0 0.0
        %560 = vmatpush1.msra.mxu0 0.0
        %561 = vmatprep.mubr.f32.mxu0 0.0
        %562 = vmatmul.mubr.f32.gmra.mrb[0].mxu0 %v492
        %v563 = vpop.f32.mrb[0].mxu0
        %v564 = vadd.f32 %v489, %v563
        %v565 = vpop.f32.mrb[0].mxu0
        %566 = vmatprep.mubr.f32.mxu0 0.0
        %567 = vmatmul.mubr.f32.gmra.mrb[0].mxu0 %v495
        %v568 = vpop.f32.mrb[0].mxu0
        %v569 = vadd.f32 %v489, %v568
        %v570 = vpop.f32.mrb[0].mxu0
        %571 = vdwg.mxu0
        %v572 = vlaneseq
        %v573 = vshrl.u32 %v572, 7
        %v574 = vsub.s32 0, %v573
        %v575 = vrot.slane %v305, %v574
        %v576 = vmul.f32 %v390, %v575
        %v577 = vlaneseq
        %v578 = vshrl.u32 %v577, 7
        %v579 = vsub.s32 0, %v578
        %v580 = vrot.slane %v306, %v579
        %v581 = vadd.f32 %v576, %v580
        %v583 = vcombine.high %v581, %v581
        %v585 = vcombine.low %v581, %v581
        %v586 = vcombine.low %v583, %v583
        %v589 = vsel %vm483, %v581, %v585
        %v590 = vsel %vm483, %v583, %v586
        %v591 = vmul.f32 %v589, %v319
        %v592 = vmul.f32 %v589, %v320
        %v593 = vmul.f32 %v589, %v321
        %v594 = vmul.f32 %v589, %v322
        %v595 = vmul.f32 %v590, %v319
        %v596 = vmul.f32 %v590, %v320
        %v597 = vmul.f32 %v590, %v321
        %v598 = vmul.f32 %v590, %v322
        %v600 = vsel %vm490, %v591, 0
        %v603 = vsel %vm490, %v592, 0
        %v606 = vsel %vm490, %v593, 0
        %v609 = vsel %vm490, %v594, 0
        %v612 = vsel %vm490, %v564, 0
        %614 = vmatprep.subr.mxu0 0.0
        %615 = vmatpush1.xpose.msra.mxu0 %v612
        %616 = vmatprep.subr.mxu0 0.0
        %617 = vmatpush1.xpose.msra.mxu0 0.0
        %618 = vmatprep.subr.mxu0 0.0
        %619 = vmatpush1.xpose.msra.mxu0 0.0
        %620 = vmatprep.subr.mxu0 0.0
        %621 = vmatpush1.xpose.msra.mxu0 0.0
        %622 = vmatprep.subr.mxu0 0.0
        %623 = vmatpush1.xpose.msra.mxu0 0.0
        %624 = vmatprep.subr.mxu0 0.0
        %625 = vmatpush1.xpose.msra.mxu0 0.0
        %626 = vmatprep.subr.mxu0 0.0
        %627 = vmatpush1.xpose.msra.mxu0 0.0
        %628 = vmatprep.subr.mxu0 0.0
        %629 = vmatpush1.xpose.msra.mxu0 0.0
        %630 = vmatprep.subr.mxu0 0.0
        %631 = vmatpush1.xpose.msra.mxu0 0.0
        %632 = vmatprep.subr.mxu0 0.0
        %633 = vmatpush1.xpose.msra.mxu0 0.0
        %634 = vmatprep.subr.mxu0 0.0
        %635 = vmatpush1.xpose.msra.mxu0 0.0
        %636 = vmatprep.subr.mxu0 0.0
        %637 = vmatpush1.xpose.msra.mxu0 0.0
        %638 = vmatprep.subr.mxu0 0.0
        %639 = vmatpush1.xpose.msra.mxu0 0.0
        %640 = vmatprep.subr.mxu0 0.0
        %641 = vmatpush1.xpose.msra.mxu0 0.0
        %642 = vmatprep.subr.mxu0 0.0
        %643 = vmatpush1.xpose.msra.mxu0 0.0
        %644 = vmatprep.subr.mxu0 0.0
        %645 = vmatpush1.xpose.msra.mxu0 0.0
        %646 = vmatprep.subr.mxu0 0.0
        %647 = vmatpush1.xpose.msra.mxu0 0.0
        %648 = vmatprep.subr.mxu0 0.0
        %649 = vmatpush1.xpose.msra.mxu0 0.0
        %650 = vmatprep.subr.mxu0 0.0
        %651 = vmatpush1.xpose.msra.mxu0 0.0
        %652 = vmatprep.subr.mxu0 0.0
        %653 = vmatpush1.xpose.msra.mxu0 0.0
        %654 = vmatprep.subr.mxu0 0.0
        %655 = vmatpush1.xpose.msra.mxu0 0.0
        %656 = vmatprep.subr.mxu0 0.0
        %657 = vmatpush1.xpose.msra.mxu0 0.0
        %658 = vmatprep.subr.mxu0 0.0
        %659 = vmatpush1.xpose.msra.mxu0 0.0
        %660 = vmatprep.subr.mxu0 0.0
        %661 = vmatpush1.xpose.msra.mxu0 0.0
        %662 = vmatprep.subr.mxu0 0.0
        %663 = vmatpush1.xpose.msra.mxu0 0.0
        %664 = vmatprep.subr.mxu0 0.0
        %665 = vmatpush1.xpose.msra.mxu0 0.0
        %666 = vmatprep.subr.mxu0 0.0
        %667 = vmatpush1.xpose.msra.mxu0 0.0
        %668 = vmatprep.subr.mxu0 0.0
        %669 = vmatpush1.xpose.msra.mxu0 0.0
        %670 = vmatprep.subr.mxu0 0.0
        %671 = vmatpush1.xpose.msra.mxu0 0.0
        %672 = vmatprep.subr.mxu0 0.0
        %673 = vmatpush1.xpose.msra.mxu0 0.0
        %674 = vmatprep.subr.mxu0 0.0
        %675 = vmatpush1.xpose.msra.mxu0 0.0
        %676 = vmatprep.subr.mxu0 0.0
        %677 = vmatpush1.xpose.msra.mxu0 0.0
        %678 = vmatprep.mubr.f32.mxu0 0.0
        %679 = vmatmul.mubr.f32.gmra.mrb[0].mxu0 %v600
        %v680 = vpop.f32.mrb[0].mxu0
        %v681 = vadd.f32 0.0, %v680
        %v682 = vpop.f32.mrb[0].mxu0
        %683 = vmatprep.mubr.f32.mxu0 0.0
        %684 = vmatmul.mubr.f32.gmra.mrb[0].mxu0 %v603
        %v685 = vpop.f32.mrb[0].mxu0
        %v686 = vadd.f32 0.0, %v685
        %v687 = vpop.f32.mrb[0].mxu0
        %688 = vmatprep.mubr.f32.mxu0 0.0
        %689 = vmatmul.mubr.f32.gmra.mrb[0].mxu0 %v606
        %v690 = vpop.f32.mrb[0].mxu0
        %v691 = vadd.f32 0.0, %v690
        %v692 = vpop.f32.mrb[0].mxu0
        %693 = vmatprep.mubr.f32.mxu0 0.0
        %694 = vmatmul.mubr.f32.gmra.mrb[0].mxu0 %v609
        %v695 = vpop.f32.mrb[0].mxu0
        %v696 = vadd.f32 0.0, %v695
        %v697 = vpop.f32.mrb[0].mxu0
        %698 = vdwg.mxu0
        %v700 = vsel %vm490, %v595, 0
        %v703 = vsel %vm490, %v596, 0
        %v706 = vsel %vm490, %v597, 0
        %v709 = vsel %vm490, %v598, 0
        %v712 = vsel %vm490, %v569, 0
        %714 = vmatprep.subr.mxu0 0.0
        %715 = vmatpush1.xpose.msra.mxu0 %v712
        %716 = vmatprep.subr.mxu0 0.0
        %717 = vmatpush1.xpose.msra.mxu0 0.0
        %718 = vmatprep.subr.mxu0 0.0
        %719 = vmatpush1.xpose.msra.mxu0 0.0
        %720 = vmatprep.subr.mxu0 0.0
        %721 = vmatpush1.xpose.msra.mxu0 0.0
        %722 = vmatprep.subr.mxu0 0.0
        %723 = vmatpush1.xpose.msra.mxu0 0.0
        %724 = vmatprep.subr.mxu0 0.0
        %725 = vmatpush1.xpose.msra.mxu0 0.0
        %726 = vmatprep.subr.mxu0 0.0
        %727 = vmatpush1.xpose.msra.mxu0 0.0
        %728 = vmatprep.subr.mxu0 0.0
        %729 = vmatpush1.xpose.msra.mxu0 0.0
        %730 = vmatprep.subr.mxu0 0.0
        %731 = vmatpush1.xpose.msra.mxu0 0.0
        %732 = vmatprep.subr.mxu0 0.0
        %733 = vmatpush1.xpose.msra.mxu0 0.0
        %734 = vmatprep.subr.mxu0 0.0
        %735 = vmatpush1.xpose.msra.mxu0 0.0
        %736 = vmatprep.subr.mxu0 0.0
        %737 = vmatpush1.xpose.msra.mxu0 0.0
        %738 = vmatprep.subr.mxu0 0.0
        %739 = vmatpush1.xpose.msra.mxu0 0.0
        %740 = vmatprep.subr.mxu0 0.0
        %741 = vmatpush1.xpose.msra.mxu0 0.0
        %742 = vmatprep.subr.mxu0 0.0
        %743 = vmatpush1.xpose.msra.mxu0 0.0
        %744 = vmatprep.subr.mxu0 0.0
        %745 = vmatpush1.xpose.msra.mxu0 0.0
        %746 = vmatprep.subr.mxu0 0.0
        %747 = vmatpush1.xpose.msra.mxu0 0.0
        %748 = vmatprep.subr.mxu0 0.0
        %749 = vmatpush1.xpose.msra.mxu0 0.0
        %750 = vmatprep.subr.mxu0 0.0
        %751 = vmatpush1.xpose.msra.mxu0 0.0
        %752 = vmatprep.subr.mxu0 0.0
        %753 = vmatpush1.xpose.msra.mxu0 0.0
        %754 = vmatprep.subr.mxu0 0.0
        %755 = vmatpush1.xpose.msra.mxu0 0.0
        %756 = vmatprep.subr.mxu0 0.0
        %757 = vmatpush1.xpose.msra.mxu0 0.0
        %758 = vmatprep.subr.mxu0 0.0
        %759 = vmatpush1.xpose.msra.mxu0 0.0
        %760 = vmatprep.subr.mxu0 0.0
        %761 = vmatpush1.xpose.msra.mxu0 0.0
        %762 = vmatprep.subr.mxu0 0.0
        %763 = vmatpush1.xpose.msra.mxu0 0.0
        %764 = vmatprep.subr.mxu0 0.0
        %765 = vmatpush1.xpose.msra.mxu0 0.0
        %766 = vmatprep.subr.mxu0 0.0
        %767 = vmatpush1.xpose.msra.mxu0 0.0
        %768 = vmatprep.subr.mxu0 0.0
        %769 = vmatpush1.xpose.msra.mxu0 0.0
        %770 = vmatprep.subr.mxu0 0.0
        %771 = vmatpush1.xpose.msra.mxu0 0.0
        %772 = vmatprep.subr.mxu0 0.0
        %773 = vmatpush1.xpose.msra.mxu0 0.0
        %774 = vmatprep.subr.mxu0 0.0
        %775 = vmatpush1.xpose.msra.mxu0 0.0
        %776 = vmatprep.subr.mxu0 0.0
        %777 = vmatpush1.xpose.msra.mxu0 0.0
        %778 = vmatprep.mubr.f32.mxu0 0.0
        %779 = vmatmul.mubr.f32.gmra.mrb[0].mxu0 %v700
        %v780 = vpop.f32.mrb[0].mxu0
        %v781 = vadd.f32 0.0, %v780
        %v782 = vpop.f32.mrb[0].mxu0
        %783 = vmatprep.mubr.f32.mxu0 0.0
        %784 = vmatmul.mubr.f32.gmra.mrb[0].mxu0 %v703
        %v785 = vpop.f32.mrb[0].mxu0
        %v786 = vadd.f32 0.0, %v785
        %v787 = vpop.f32.mrb[0].mxu0
        %788 = vmatprep.mubr.f32.mxu0 0.0
        %789 = vmatmul.mubr.f32.gmra.mrb[0].mxu0 %v706
        %v790 = vpop.f32.mrb[0].mxu0
        %v791 = vadd.f32 0.0, %v790
        %v792 = vpop.f32.mrb[0].mxu0
        %793 = vmatprep.mubr.f32.mxu0 0.0
        %794 = vmatmul.mubr.f32.gmra.mrb[0].mxu0 %v709
        %v795 = vpop.f32.mrb[0].mxu0
        %v796 = vadd.f32 0.0, %v795
        %v797 = vpop.f32.mrb[0].mxu0
        %798 = vdwg.mxu0
        %v799 = vmul.f32 %v681, 0.5
        %v800 = vmul.f32 %v686, 0.5
        %v801 = vmul.f32 %v691, 0.5
        %v802 = vmul.f32 %v696, 0.5
        %v803 = vmul.f32 %v781, 0.5
        %v804 = vmul.f32 %v786, 0.5
        %v805 = vmul.f32 %v791, 0.5
        %v806 = vmul.f32 %v796, 0.5
        %vm807 = vcmask 64512
        %v808 = vsel %vm807, %v799, -inf
        %809 = vmax.xlane.f32.xlu0 %v808
        %v810 = vpop.xlane.xlu0 %809
        %v811 = vsel %vm807, %v800, -inf
        %812 = vmax.xlane.f32.xlu0 %v811
        %v813 = vpop.xlane.xlu0 %812
        %v814 = vsel %vm807, %v801, -inf
        %815 = vmax.xlane.f32.xlu0 %v814
        %v816 = vpop.xlane.xlu0 %815
        %v817 = vsel %vm807, %v802, -inf
        %818 = vmax.xlane.f32.xlu0 %v817
        %v819 = vpop.xlane.xlu0 %818
        %v820 = vsel %vm807, %v803, -inf
        %821 = vmax.xlane.f32.xlu0 %v820
        %v822 = vpop.xlane.xlu0 %821
        %v823 = vsel %vm807, %v804, -inf
        %824 = vmax.xlane.f32.xlu0 %v823
        %v825 = vpop.xlane.xlu0 %824
        %v826 = vsel %vm807, %v805, -inf
        %827 = vmax.xlane.f32.xlu0 %v826
        %v828 = vpop.xlane.xlu0 %827
        %v829 = vsel %vm807, %v806, -inf
        %830 = vmax.xlane.f32.xlu0 %v829
        %v831 = vpop.xlane.xlu0 %830
        %v832 = vsub.f32 %v799, %v810
        %v833 = vsub.f32 %v800, %v813
        %v834 = vsub.f32 %v801, %v816
        %v835 = vsub.f32 %v802, %v819
        %v836 = vsub.f32 %v803, %v822
        %v837 = vsub.f32 %v804, %v825
        %v838 = vsub.f32 %v805, %v828
        %v839 = vsub.f32 %v806, %v831
        %v840 = vmul.f32 %v832, 1.442695
        %v841 = vpow.pop %v840
        %v842 = vmul.f32 %v833, 1.442695
        %v843 = vpow.pop %v842
        %v844 = vmul.f32 %v834, 1.442695
        %v845 = vpow.pop %v844
        %v846 = vmul.f32 %v835, 1.442695
        %v847 = vpow.pop %v846
        %v848 = vmul.f32 %v836, 1.442695
        %v849 = vpow.pop %v848
        %v850 = vmul.f32 %v837, 1.442695
        %v851 = vpow.pop %v850
        %v852 = vmul.f32 %v838, 1.442695
        %v853 = vpow.pop %v852
        %v854 = vmul.f32 %v839, 1.442695
        %v855 = vpow.pop %v854
        %v856 = vsel %vm807, %v841, 0.0
        %857 = vadd.xlane.f32.xlu0 %v856
        %v858 = vpop.xlane.xlu0 %857
        %v859 = vsel %vm807, %v843, 0.0
        %860 = vadd.xlane.f32.xlu0 %v859
        %v861 = vpop.xlane.xlu0 %860
        %v862 = vsel %vm807, %v845, 0.0
        %863 = vadd.xlane.f32.xlu0 %v862
        %v864 = vpop.xlane.xlu0 %863
        %v865 = vsel %vm807, %v847, 0.0
        %866 = vadd.xlane.f32.xlu0 %v865
        %v867 = vpop.xlane.xlu0 %866
        %v868 = vsel %vm807, %v849, 0.0
        %869 = vadd.xlane.f32.xlu0 %v868
        %v870 = vpop.xlane.xlu0 %869
        %v871 = vsel %vm807, %v851, 0.0
        %872 = vadd.xlane.f32.xlu0 %v871
        %v873 = vpop.xlane.xlu0 %872
        %v874 = vsel %vm807, %v853, 0.0
        %875 = vadd.xlane.f32.xlu0 %v874
        %v876 = vpop.xlane.xlu0 %875
        %v877 = vsel %vm807, %v855, 0.0
        %878 = vadd.xlane.f32.xlu0 %v877
        %v879 = vpop.xlane.xlu0 %878
        %v880 = vrcp.pop %v858
        %v881 = vmul.f32 %v841, %v880
        %v882 = vrcp.pop %v861
        %v883 = vmul.f32 %v843, %v882
        %v884 = vrcp.pop %v864
        %v885 = vmul.f32 %v845, %v884
        %v886 = vrcp.pop %v867
        %v887 = vmul.f32 %v847, %v886
        %v888 = vrcp.pop %v870
        %v889 = vmul.f32 %v849, %v888
        %v890 = vrcp.pop %v873
        %v891 = vmul.f32 %v851, %v890
        %v892 = vrcp.pop %v876
        %v893 = vmul.f32 %v853, %v892
        %v894 = vrcp.pop %v879
        %v895 = vmul.f32 %v855, %v894
        %896 = vrot.lane.b32.xlu0 %v564, 96
        %v897 = vpop.permute.xlu0 %896
        %v900 = vsel %vm807, %v881, 0
        %v903 = vsel %vm807, %v883, 0
        %v906 = vsel %vm807, %v885, 0
        %v909 = vsel %vm807, %v887, 0
        %911 = vmatprep.subr.mxu0 0.0
        %912 = vmatpush1.msra.mxu0 %v897
        %913 = vmatprep.subr.mxu0 0.0
        %914 = vmatpush1.msra.mxu0 0.0
        %915 = vmatprep.subr.mxu0 0.0
        %916 = vmatpush1.msra.mxu0 0.0
        %917 = vmatprep.subr.mxu0 0.0
        %918 = vmatpush1.msra.mxu0 0.0
        %919 = vmatprep.subr.mxu0 0.0
        %920 = vmatpush1.msra.mxu0 0.0
        %921 = vmatprep.subr.mxu0 0.0
        %922 = vmatpush1.msra.mxu0 0.0
        %923 = vmatprep.subr.mxu0 0.0
        %924 = vmatpush1.msra.mxu0 0.0
        %925 = vmatprep.subr.mxu0 0.0
        %926 = vmatpush1.msra.mxu0 0.0
        %927 = vmatprep.subr.mxu0 0.0
        %928 = vmatpush1.msra.mxu0 0.0
        %929 = vmatprep.subr.mxu0 0.0
        %930 = vmatpush1.msra.mxu0 0.0
        %931 = vmatprep.subr.mxu0 0.0
        %932 = vmatpush1.msra.mxu0 0.0
        %933 = vmatprep.subr.mxu0 0.0
        %934 = vmatpush1.msra.mxu0 0.0
        %935 = vmatprep.subr.mxu0 0.0
        %936 = vmatpush1.msra.mxu0 0.0
        %937 = vmatprep.subr.mxu0 0.0
        %938 = vmatpush1.msra.mxu0 0.0
        %939 = vmatprep.subr.mxu0 0.0
        %940 = vmatpush1.msra.mxu0 0.0
        %941 = vmatprep.subr.mxu0 0.0
        %942 = vmatpush1.msra.mxu0 0.0
        %943 = vmatprep.subr.mxu0 0.0
        %944 = vmatpush1.msra.mxu0 0.0
        %945 = vmatprep.subr.mxu0 0.0
        %946 = vmatpush1.msra.mxu0 0.0
        %947 = vmatprep.subr.mxu0 0.0
        %948 = vmatpush1.msra.mxu0 0.0
        %949 = vmatprep.subr.mxu0 0.0
        %950 = vmatpush1.msra.mxu0 0.0
        %951 = vmatprep.subr.mxu0 0.0
        %952 = vmatpush1.msra.mxu0 0.0
        %953 = vmatprep.subr.mxu0 0.0
        %954 = vmatpush1.msra.mxu0 0.0
        %955 = vmatprep.subr.mxu0 0.0
        %956 = vmatpush1.msra.mxu0 0.0
        %957 = vmatprep.subr.mxu0 0.0
        %958 = vmatpush1.msra.mxu0 0.0
        %959 = vmatprep.subr.mxu0 0.0
        %960 = vmatpush1.msra.mxu0 0.0
        %961 = vmatprep.subr.mxu0 0.0
        %962 = vmatpush1.msra.mxu0 0.0
        %963 = vmatprep.subr.mxu0 0.0
        %964 = vmatpush1.msra.mxu0 0.0
        %965 = vmatprep.subr.mxu0 0.0
        %966 = vmatpush1.msra.mxu0 0.0
        %967 = vmatprep.subr.mxu0 0.0
        %968 = vmatpush1.msra.mxu0 0.0
        %969 = vmatprep.subr.mxu0 0.0
        %970 = vmatpush1.msra.mxu0 0.0
        %971 = vmatprep.subr.mxu0 0.0
        %972 = vmatpush1.msra.mxu0 0.0
        %973 = vmatprep.subr.mxu0 0.0
        %974 = vmatpush1.msra.mxu0 0.0
        %975 = vmatprep.mubr.f32.mxu0 0.0
        %976 = vmatmul.mubr.f32.gmra.mrb[0].mxu0 %v900
        %v977 = vpop.f32.mrb[0].mxu0
        %v978 = vadd.f32 0.0, %v977
        %v979 = vpop.f32.mrb[0].mxu0
        %980 = vmatprep.mubr.f32.mxu0 0.0
        %981 = vmatmul.mubr.f32.gmra.mrb[0].mxu0 %v903
        %v982 = vpop.f32.mrb[0].mxu0
        %v983 = vadd.f32 0.0, %v982
        %v984 = vpop.f32.mrb[0].mxu0
        %985 = vmatprep.mubr.f32.mxu0 0.0
        %986 = vmatmul.mubr.f32.gmra.mrb[0].mxu0 %v906
        %v987 = vpop.f32.mrb[0].mxu0
        %v988 = vadd.f32 0.0, %v987
        %v989 = vpop.f32.mrb[0].mxu0
        %990 = vmatprep.mubr.f32.mxu0 0.0
        %991 = vmatmul.mubr.f32.gmra.mrb[0].mxu0 %v909
        %v992 = vpop.f32.mrb[0].mxu0
        %v993 = vadd.f32 0.0, %v992
        %v994 = vpop.f32.mrb[0].mxu0
        %995 = vdwg.mxu0
        %996 = vrot.lane.b32.xlu0 %v569, 96
        %v997 = vpop.permute.xlu0 %996
        %v1000 = vsel %vm807, %v889, 0
        %v1003 = vsel %vm807, %v891, 0
        %v1006 = vsel %vm807, %v893, 0
        %v1009 = vsel %vm807, %v895, 0
        %1011 = vmatprep.subr.mxu0 0.0
        %1012 = vmatpush1.msra.mxu0 %v997
        %1013 = vmatprep.subr.mxu0 0.0
        %1014 = vmatpush1.msra.mxu0 0.0
        %1015 = vmatprep.subr.mxu0 0.0
        %1016 = vmatpush1.msra.mxu0 0.0
        %1017 = vmatprep.subr.mxu0 0.0
        %1018 = vmatpush1.msra.mxu0 0.0
        %1019 = vmatprep.subr.mxu0 0.0
        %1020 = vmatpush1.msra.mxu0 0.0
        %1021 = vmatprep.subr.mxu0 0.0
        %1022 = vmatpush1.msra.mxu0 0.0
        %1023 = vmatprep.subr.mxu0 0.0
        %1024 = vmatpush1.msra.mxu0 0.0
        %1025 = vmatprep.subr.mxu0 0.0
        %1026 = vmatpush1.msra.mxu0 0.0
        %1027 = vmatprep.subr.mxu0 0.0
        %1028 = vmatpush1.msra.mxu0 0.0
        %1029 = vmatprep.subr.mxu0 0.0
        %1030 = vmatpush1.msra.mxu0 0.0
        %1031 = vmatprep.subr.mxu0 0.0
        %1032 = vmatpush1.msra.mxu0 0.0
        %1033 = vmatprep.subr.mxu0 0.0
        %1034 = vmatpush1.msra.mxu0 0.0
        %1035 = vmatprep.subr.mxu0 0.0
        %1036 = vmatpush1.msra.mxu0 0.0
        %1037 = vmatprep.subr.mxu0 0.0
        %1038 = vmatpush1.msra.mxu0 0.0
        %1039 = vmatprep.subr.mxu0 0.0
        %1040 = vmatpush1.msra.mxu0 0.0
        %1041 = vmatprep.subr.mxu0 0.0
        %1042 = vmatpush1.msra.mxu0 0.0
        %1043 = vmatprep.subr.mxu0 0.0
        %1044 = vmatpush1.msra.mxu0 0.0
        %1045 = vmatprep.subr.mxu0 0.0
        %1046 = vmatpush1.msra.mxu0 0.0
        %1047 = vmatprep.subr.mxu0 0.0
        %1048 = vmatpush1.msra.mxu0 0.0
        %1049 = vmatprep.subr.mxu0 0.0
        %1050 = vmatpush1.msra.mxu0 0.0
        %1051 = vmatprep.subr.mxu0 0.0
        %1052 = vmatpush1.msra.mxu0 0.0
        %1053 = vmatprep.subr.mxu0 0.0
        %1054 = vmatpush1.msra.mxu0 0.0
        %1055 = vmatprep.subr.mxu0 0.0
        %1056 = vmatpush1.msra.mxu0 0.0
        %1057 = vmatprep.subr.mxu0 0.0
        %1058 = vmatpush1.msra.mxu0 0.0
        %1059 = vmatprep.subr.mxu0 0.0
        %1060 = vmatpush1.msra.mxu0 0.0
        %1061 = vmatprep.subr.mxu0 0.0
        %1062 = vmatpush1.msra.mxu0 0.0
        %1063 = vmatprep.subr.mxu0 0.0
        %1064 = vmatpush1.msra.mxu0 0.0
        %1065 = vmatprep.subr.mxu0 0.0
        %1066 = vmatpush1.msra.mxu0 0.0
        %1067 = vmatprep.subr.mxu0 0.0
        %1068 = vmatpush1.msra.mxu0 0.0
        %1069 = vmatprep.subr.mxu0 0.0
        %1070 = vmatpush1.msra.mxu0 0.0
        %1071 = vmatprep.subr.mxu0 0.0
        %1072 = vmatpush1.msra.mxu0 0.0
        %1073 = vmatprep.subr.mxu0 0.0
        %1074 = vmatpush1.msra.mxu0 0.0
        %1075 = vmatprep.mubr.f32.mxu0 0.0
        %1076 = vmatmul.mubr.f32.gmra.mrb[0].mxu0 %v1000
        %v1077 = vpop.f32.mrb[0].mxu0
        %v1078 = vadd.f32 0.0, %v1077
        %v1079 = vpop.f32.mrb[0].mxu0
        %1080 = vmatprep.mubr.f32.mxu0 0.0
        %1081 = vmatmul.mubr.f32.gmra.mrb[0].mxu0 %v1003
        %v1082 = vpop.f32.mrb[0].mxu0
        %v1083 = vadd.f32 0.0, %v1082
        %v1084 = vpop.f32.mrb[0].mxu0
        %1085 = vmatprep.mubr.f32.mxu0 0.0
        %1086 = vmatmul.mubr.f32.gmra.mrb[0].mxu0 %v1006
        %v1087 = vpop.f32.mrb[0].mxu0
        %v1088 = vadd.f32 0.0, %v1087
        %v1089 = vpop.f32.mrb[0].mxu0
        %1090 = vmatprep.mubr.f32.mxu0 0.0
        %1091 = vmatmul.mubr.f32.gmra.mrb[0].mxu0 %v1009
        %v1092 = vpop.f32.mrb[0].mxu0
        %v1093 = vadd.f32 0.0, %v1092
        %v1094 = vpop.f32.mrb[0].mxu0
        %1095 = vdwg.mxu0
        %v1096 = vmul.f32 %v978, %v319
        %v1097 = vmul.f32 %v983, %v320
        %v1098 = vmul.f32 %v988, %v321
        %v1099 = vmul.f32 %v993, %v322
        %v1100 = vmul.f32 %v1078, %v319
        %v1101 = vmul.f32 %v1083, %v320
        %v1102 = vmul.f32 %v1088, %v321
        %v1103 = vmul.f32 %v1093, %v322
        %vm1104 = vcmask 523264
        %v1106 = vsel %vm1104, %v323, 0
        %1108 = vmatprep.subr.mxu0 0.0
        %1109 = vmatpush1.msra.mxu0 %v1096
        %1110 = vmatprep.subr.mxu0 0.0
        %1111 = vmatpush1.msra.mxu0 %v1097
        %1112 = vmatprep.subr.mxu0 0.0
        %1113 = vmatpush1.msra.mxu0 %v1098
        %1114 = vmatprep.subr.mxu0 0.0
        %1115 = vmatpush1.msra.mxu0 %v1099
        %1116 = vmatprep.subr.mxu0 0.0
        %1117 = vmatpush1.msra.mxu0 %v1100
        %1118 = vmatprep.subr.mxu0 0.0
        %1119 = vmatpush1.msra.mxu0 %v1101
        %1120 = vmatprep.subr.mxu0 0.0
        %1121 = vmatpush1.msra.mxu0 %v1102
        %1122 = vmatprep.subr.mxu0 0.0
        %1123 = vmatpush1.msra.mxu0 %v1103
        %1124 = vmatprep.subr.mxu0 0.0
        %1125 = vmatpush1.msra.mxu0 0.0
        %1126 = vmatprep.subr.mxu0 0.0
        %1127 = vmatpush1.msra.mxu0 0.0
        %1128 = vmatprep.subr.mxu0 0.0
        %1129 = vmatpush1.msra.mxu0 0.0
        %1130 = vmatprep.subr.mxu0 0.0
        %1131 = vmatpush1.msra.mxu0 0.0
        %1132 = vmatprep.subr.mxu0 0.0
        %1133 = vmatpush1.msra.mxu0 0.0
        %1134 = vmatprep.subr.mxu0 0.0
        %1135 = vmatpush1.msra.mxu0 0.0
        %1136 = vmatprep.subr.mxu0 0.0
        %1137 = vmatpush1.msra.mxu0 0.0
        %1138 = vmatprep.subr.mxu0 0.0
        %1139 = vmatpush1.msra.mxu0 0.0
        %1140 = vmatprep.subr.mxu0 0.0
        %1141 = vmatpush1.msra.mxu0 0.0
        %1142 = vmatprep.subr.mxu0 0.0
        %1143 = vmatpush1.msra.mxu0 0.0
        %1144 = vmatprep.subr.mxu0 0.0
        %1145 = vmatpush1.msra.mxu0 0.0
        %1146 = vmatprep.subr.mxu0 0.0
        %1147 = vmatpush1.msra.mxu0 0.0
        %1148 = vmatprep.subr.mxu0 0.0
        %1149 = vmatpush1.msra.mxu0 0.0
        %1150 = vmatprep.subr.mxu0 0.0
        %1151 = vmatpush1.msra.mxu0 0.0
        %1152 = vmatprep.subr.mxu0 0.0
        %1153 = vmatpush1.msra.mxu0 0.0
        %1154 = vmatprep.subr.mxu0 0.0
        %1155 = vmatpush1.msra.mxu0 0.0
        %1156 = vmatprep.subr.mxu0 0.0
        %1157 = vmatpush1.msra.mxu0 0.0
        %1158 = vmatprep.subr.mxu0 0.0
        %1159 = vmatpush1.msra.mxu0 0.0
        %1160 = vmatprep.subr.mxu0 0.0
        %1161 = vmatpush1.msra.mxu0 0.0
        %1162 = vmatprep.subr.mxu0 0.0
        %1163 = vmatpush1.msra.mxu0 0.0
        %1164 = vmatprep.subr.mxu0 0.0
        %1165 = vmatpush1.msra.mxu0 0.0
        %1166 = vmatprep.subr.mxu0 0.0
        %1167 = vmatpush1.msra.mxu0 0.0
        %1168 = vmatprep.subr.mxu0 0.0
        %1169 = vmatpush1.msra.mxu0 0.0
        %1170 = vmatprep.subr.mxu0 0.0
        %1171 = vmatpush1.msra.mxu0 0.0
        %1172 = vmatprep.mubr.f32.mxu0 0.0
        %1173 = vmatmul.mubr.f32.gmra.mrb[0].mxu0 %v1106
        %v1174 = vpop.f32.mrb[0].mxu0
        %v1175 = vadd.f32 0.0, %v1174
        %v1176 = vpop.f32.mrb[0].mxu0
        %1177 = vdwg.mxu0
        %v1178 = vlaneseq
        %v1179 = vshrl.u32 %v1178, 7
        %v1180 = vsub.s32 0, %v1179
        %v1181 = vrot.slane %v308, %v1180
        %v1183 = vsel %vm490, %v1175, 0
        %1185 = vmatprep.subr.mxu0 0.0
        %1186 = vmatpush1.msra.mxu0 %v315
        %1187 = vmatprep.subr.mxu0 0.0
        %1188 = vmatpush1.msra.mxu0 %v316
        %1189 = vmatprep.subr.mxu0 0.0
        %1190 = vmatpush1.msra.mxu0 %v317
        %1191 = vmatprep.subr.mxu0 0.0
        %1192 = vmatpush1.msra.mxu0 %v318
        %1193 = vmatprep.subr.mxu0 0.0
        %1194 = vmatpush1.msra.mxu0 0.0
        %1195 = vmatprep.subr.mxu0 0.0
        %1196 = vmatpush1.msra.mxu0 0.0
        %1197 = vmatprep.subr.mxu0 0.0
        %1198 = vmatpush1.msra.mxu0 0.0
        %1199 = vmatprep.subr.mxu0 0.0
        %1200 = vmatpush1.msra.mxu0 0.0
        %1201 = vmatprep.subr.mxu0 0.0
        %1202 = vmatpush1.msra.mxu0 0.0
        %1203 = vmatprep.subr.mxu0 0.0
        %1204 = vmatpush1.msra.mxu0 0.0
        %1205 = vmatprep.subr.mxu0 0.0
        %1206 = vmatpush1.msra.mxu0 0.0
        %1207 = vmatprep.subr.mxu0 0.0
        %1208 = vmatpush1.msra.mxu0 0.0
        %1209 = vmatprep.subr.mxu0 0.0
        %1210 = vmatpush1.msra.mxu0 0.0
        %1211 = vmatprep.subr.mxu0 0.0
        %1212 = vmatpush1.msra.mxu0 0.0
        %1213 = vmatprep.subr.mxu0 0.0
        %1214 = vmatpush1.msra.mxu0 0.0
        %1215 = vmatprep.subr.mxu0 0.0
        %1216 = vmatpush1.msra.mxu0 0.0
        %1217 = vmatprep.subr.mxu0 0.0
        %1218 = vmatpush1.msra.mxu0 0.0
        %1219 = vmatprep.subr.mxu0 0.0
        %1220 = vmatpush1.msra.mxu0 0.0
        %1221 = vmatprep.subr.mxu0 0.0
        %1222 = vmatpush1.msra.mxu0 0.0
        %1223 = vmatprep.subr.mxu0 0.0
        %1224 = vmatpush1.msra.mxu0 0.0
        %1225 = vmatprep.subr.mxu0 0.0
        %1226 = vmatpush1.msra.mxu0 0.0
        %1227 = vmatprep.subr.mxu0 0.0
        %1228 = vmatpush1.msra.mxu0 0.0
        %1229 = vmatprep.subr.mxu0 0.0
        %1230 = vmatpush1.msra.mxu0 0.0
        %1231 = vmatprep.subr.mxu0 0.0
        %1232 = vmatpush1.msra.mxu0 0.0
        %1233 = vmatprep.subr.mxu0 0.0
        %1234 = vmatpush1.msra.mxu0 0.0
        %1235 = vmatprep.subr.mxu0 0.0
        %1236 = vmatpush1.msra.mxu0 0.0
        %1237 = vmatprep.subr.mxu0 0.0
        %1238 = vmatpush1.msra.mxu0 0.0
        %1239 = vmatprep.subr.mxu0 0.0
        %1240 = vmatpush1.msra.mxu0 0.0
        %1241 = vmatprep.subr.mxu0 0.0
        %1242 = vmatpush1.msra.mxu0 0.0
        %1243 = vmatprep.subr.mxu0 0.0
        %1244 = vmatpush1.msra.mxu0 0.0
        %1245 = vmatprep.subr.mxu0 0.0
        %1246 = vmatpush1.msra.mxu0 0.0
        %1247 = vmatprep.subr.mxu0 0.0
        %1248 = vmatpush1.msra.mxu0 0.0
        %1249 = vmatprep.mubr.f32.mxu0 0.0
        %1250 = vmatmul.mubr.f32.gmra.mrb[0].mxu0 %v1183
        %v1251 = vpop.f32.mrb[0].mxu0
        %v1252 = vadd.f32 %v1181, %v1251
        %v1253 = vpop.f32.mrb[0].mxu0
        %1254 = vdwg.mxu0
        %v1255 = vpack.c.bf16 %v1252, %v1252
        %v1256 = vld [vmem:[%s262] sm:$0xff]
        %v1257 = vld [vmem:[%s262 + $0x8] sm:$0xff]
        %v1258 = vld [vmem:[%s262 + $0x10] sm:$0xff]
        %v1259 = vld [vmem:[%s262 + $0x18] sm:$0xff]
        %v1260 = vld [vmem:[%s262 + $0x20] sm:$0xff]
        %v1261 = vld [vmem:[%s262 + $0x28] sm:$0xff]
        %v1262 = vld [vmem:[%s262 + $0x30] sm:$0xff]
        %v1263 = vld [vmem:[%s262 + $0x38] sm:$0xff]
        %v1264 = vld [vmem:[%s262 + $0x40] sm:$0xff]
        %v1265 = vld [vmem:[%s262 + $0x48] sm:$0xff]
        %v1266 = vld [vmem:[%s262 + $0x50] sm:$0xff]
        %v1267 = vld [vmem:[%s262 + $0x58] sm:$0xff]
        %v1268 = vld [vmem:[%s262 + $0x60] sm:$0xff]
        %v1269 = vld [vmem:[%s262 + $0x68] sm:$0xff]
        %v1270 = vld [vmem:[%s262 + $0x70] sm:$0xff]
        %v1271 = vld [vmem:[%s262 + $0x78] sm:$0xff]
        %v1272 = vld [vmem:[%s262 + $0x80] sm:$0xff]
        %v1273 = vld [vmem:[%s262 + $0x88] sm:$0xff]
        %v1274 = vld [vmem:[%s262 + $0x90] sm:$0xff]
        %v1275 = vld [vmem:[%s262 + $0x98] sm:$0xff]
        %v1276 = vld [vmem:[%s262 + $0xa0] sm:$0xff]
        %v1277 = vld [vmem:[%s262 + $0xa8] sm:$0xff]
        %v1278 = vld [vmem:[%s262 + $0xb0] sm:$0xff]
        %v1279 = vld [vmem:[%s262 + $0xb8] sm:$0xff]
        %v1280 = vld [vmem:[%s262 + $0xc0] sm:$0xff]
        %v1281 = vld [vmem:[%s262 + $0xc8] sm:$0xff]
        %v1282 = vld [vmem:[%s262 + $0xd0] sm:$0xff]
        %v1283 = vld [vmem:[%s262 + $0xd8] sm:$0xff]
        %v1284 = vld [vmem:[%s262 + $0xe0] sm:$0xff]
        %v1285 = vld [vmem:[%s262 + $0xe8] sm:$0xff]
        %v1286 = vld [vmem:[%s262 + $0xf0] sm:$0xff]
        %v1287 = vld [vmem:[%s262 + $0xf8] sm:$0xff]
        %v1288 = vld [vmem:[%s293] sm:$0xff]
        %v1289 = vld [vmem:[%s293 + $0x8] sm:$0xff]
        %v1292 = vlaneseq
        %v1293 = vshrl.u32 %v1292, 7
        %v1294 = vsub.s32 0, %v1293
        %v1295 = vrot.slane %v1288, %v1294
        %v1296 = vlaneseq
        %v1297 = vshrl.u32 %v1296, 7
        %v1298 = vsub.s32 1, %v1297
        %v1299 = vrot.slane %v1288, %v1298
        %v1300 = vlaneseq
        %v1301 = vshrl.u32 %v1300, 7
        %v1302 = vsub.s32 2, %v1301
        %v1303 = vrot.slane %v1288, %v1302
        %v1304 = vlaneseq
        %v1305 = vshrl.u32 %v1304, 7
        %v1306 = vsub.s32 3, %v1305
        %v1307 = vrot.slane %v1288, %v1306
        %v1308 = vlaneseq
        %v1309 = vshrl.u32 %v1308, 7
        %v1310 = vsub.s32 4, %v1309
        %v1311 = vrot.slane %v1288, %v1310
        %v1312 = vlaneseq
        %v1313 = vshrl.u32 %v1312, 7
        %v1314 = vsub.s32 5, %v1313
        %v1315 = vrot.slane %v1288, %v1314
        %v1316 = vlaneseq
        %v1317 = vshrl.u32 %v1316, 7
        %v1318 = vsub.s32 6, %v1317
        %v1319 = vrot.slane %v1288, %v1318
        %v1320 = vlaneseq
        %v1321 = vshrl.u32 %v1320, 7
        %v1322 = vsub.s32 7, %v1321
        %v1323 = vrot.slane %v1288, %v1322
        %v1324 = vlaneseq
        %v1325 = vshrl.u32 %v1324, 7
        %v1326 = vsub.s32 0, %v1325
        %v1327 = vrot.slane %v1289, %v1326
        %v1328 = vlaneseq
        %v1329 = vshrl.u32 %v1328, 7
        %v1330 = vsub.s32 1, %v1329
        %v1331 = vrot.slane %v1289, %v1330
        %v1332 = vlaneseq
        %v1333 = vshrl.u32 %v1332, 7
        %v1334 = vsub.s32 2, %v1333
        %v1335 = vrot.slane %v1289, %v1334
        %v1336 = vlaneseq
        %v1337 = vshrl.u32 %v1336, 7
        %v1338 = vsub.s32 3, %v1337
        %v1339 = vrot.slane %v1289, %v1338
        %v1340 = vlaneseq
        %v1341 = vshrl.u32 %v1340, 7
        %v1342 = vsub.s32 4, %v1341
        %v1343 = vrot.slane %v1289, %v1342
        %v1344 = vlaneseq
        %v1345 = vshrl.u32 %v1344, 7
        %v1346 = vsub.s32 5, %v1345
        %v1347 = vrot.slane %v1289, %v1346
        %v1348 = vlaneseq
        %v1349 = vshrl.u32 %v1348, 7
        %v1350 = vsub.s32 6, %v1349
        %v1351 = vrot.slane %v1289, %v1350
        %v1352 = vlaneseq
        %v1353 = vshrl.u32 %v1352, 7
        %v1354 = vsub.s32 7, %v1353
        %v1355 = vrot.slane %v1289, %v1354
        %v1404 = vunpack.c.l.b16 %v1256
        %v1405 = vunpack.c.h.b16 %v1256
        %v1406 = vunpack.c.l.b16 %v1257
        %v1407 = vunpack.c.h.b16 %v1257
        %v1408 = vunpack.c.l.b16 %v1258
        %v1409 = vunpack.c.h.b16 %v1258
        %v1410 = vunpack.c.l.b16 %v1259
        %v1411 = vunpack.c.h.b16 %v1259
        %v1412 = vunpack.c.l.b16 %v1260
        %v1413 = vunpack.c.h.b16 %v1260
        %v1414 = vunpack.c.l.b16 %v1261
        %v1415 = vunpack.c.h.b16 %v1261
        %v1416 = vunpack.c.l.b16 %v1262
        %v1417 = vunpack.c.h.b16 %v1262
        %v1418 = vunpack.c.l.b16 %v1263
        %v1419 = vunpack.c.h.b16 %v1263
        %v1420 = vunpack.c.l.b16 %v1264
        %v1421 = vunpack.c.h.b16 %v1264
        %v1422 = vunpack.c.l.b16 %v1265
        %v1423 = vunpack.c.h.b16 %v1265
        %v1424 = vunpack.c.l.b16 %v1266
        %v1425 = vunpack.c.h.b16 %v1266
        %v1426 = vunpack.c.l.b16 %v1267
        %v1427 = vunpack.c.h.b16 %v1267
        %v1428 = vunpack.c.l.b16 %v1268
        %v1429 = vunpack.c.h.b16 %v1268
        %v1430 = vunpack.c.l.b16 %v1269
        %v1431 = vunpack.c.h.b16 %v1269
        %v1432 = vunpack.c.l.b16 %v1270
        %v1433 = vunpack.c.h.b16 %v1270
        %v1434 = vunpack.c.l.b16 %v1271
        %v1435 = vunpack.c.h.b16 %v1271
        %v1436 = vunpack.c.l.b16 %v1272
        %v1437 = vunpack.c.h.b16 %v1272
        %v1438 = vunpack.c.l.b16 %v1273
        %v1439 = vunpack.c.h.b16 %v1273
        %v1440 = vunpack.c.l.b16 %v1274
        %v1441 = vunpack.c.h.b16 %v1274
        %v1442 = vunpack.c.l.b16 %v1275
        %v1443 = vunpack.c.h.b16 %v1275
        %v1444 = vunpack.c.l.b16 %v1276
        %v1445 = vunpack.c.h.b16 %v1276
        %v1446 = vunpack.c.l.b16 %v1277
        %v1447 = vunpack.c.h.b16 %v1277
        %v1448 = vunpack.c.l.b16 %v1278
        %v1449 = vunpack.c.h.b16 %v1278
        %v1450 = vunpack.c.l.b16 %v1279
        %v1451 = vunpack.c.h.b16 %v1279
        %v1452 = vunpack.c.l.b16 %v1280
        %v1453 = vunpack.c.h.b16 %v1280
        %v1454 = vunpack.c.l.b16 %v1281
        %v1455 = vunpack.c.h.b16 %v1281
        %v1456 = vunpack.c.l.b16 %v1282
        %v1457 = vunpack.c.h.b16 %v1282
        %v1458 = vunpack.c.l.b16 %v1283
        %v1459 = vunpack.c.h.b16 %v1283
        %v1460 = vunpack.c.l.b16 %v1284
        %v1461 = vunpack.c.h.b16 %v1284
        %v1462 = vunpack.c.l.b16 %v1285
        %v1463 = vunpack.c.h.b16 %v1285
        %v1464 = vunpack.c.l.b16 %v1286
        %v1465 = vunpack.c.h.b16 %v1286
        %v1466 = vunpack.c.l.b16 %v1287
        %v1467 = vunpack.c.h.b16 %v1287
        %v1468 = vpack.c.b16 %v1420, %v1404
        %v1469 = vpack.c.b16 %v1421, %v1405
        %v1470 = vpack.c.b16 %v1422, %v1406
        %v1471 = vpack.c.b16 %v1423, %v1407
        %v1472 = vpack.c.b16 %v1424, %v1408
        %v1473 = vpack.c.b16 %v1425, %v1409
        %v1474 = vpack.c.b16 %v1426, %v1410
        %v1475 = vpack.c.b16 %v1427, %v1411
        %v1476 = vpack.c.b16 %v1428, %v1412
        %v1477 = vpack.c.b16 %v1429, %v1413
        %v1478 = vpack.c.b16 %v1430, %v1414
        %v1479 = vpack.c.b16 %v1431, %v1415
        %v1480 = vpack.c.b16 %v1432, %v1416
        %v1481 = vpack.c.b16 %v1433, %v1417
        %v1482 = vpack.c.b16 %v1434, %v1418
        %v1483 = vpack.c.b16 %v1435, %v1419
        %v1484 = vpack.c.b16 %v1452, %v1436
        %v1485 = vpack.c.b16 %v1453, %v1437
        %v1486 = vpack.c.b16 %v1454, %v1438
        %v1487 = vpack.c.b16 %v1455, %v1439
        %v1488 = vpack.c.b16 %v1456, %v1440
        %v1489 = vpack.c.b16 %v1457, %v1441
        %v1490 = vpack.c.b16 %v1458, %v1442
        %v1491 = vpack.c.b16 %v1459, %v1443
        %v1492 = vpack.c.b16 %v1460, %v1444
        %v1493 = vpack.c.b16 %v1461, %v1445
        %v1494 = vpack.c.b16 %v1462, %v1446
        %v1495 = vpack.c.b16 %v1463, %v1447
        %v1496 = vpack.c.b16 %v1464, %v1448
        %v1497 = vpack.c.b16 %v1465, %v1449
        %v1498 = vpack.c.b16 %v1466, %v1450
        %v1499 = vpack.c.b16 %v1467, %v1451
        %v1533 = vsel %vm490, %v1255, 0
        %1535 = vmatprep.subr.bf16.mxu0 %v1469
        %1536 = vmatpush1.bf16.msra.mxu0 %v1468
        %1537 = vmatprep.subr.bf16.mxu0 %v1485
        %1538 = vmatpush1.bf16.msra.mxu0 %v1484
        %1539 = vmatprep.subr.bf16.mxu0 0
        %1540 = vmatpush1.bf16.msra.mxu0 0
        %1541 = vmatprep.subr.bf16.mxu0 0
        %1542 = vmatpush1.bf16.msra.mxu0 0
        %1543 = vmatprep.subr.bf16.mxu0 0
        %1544 = vmatpush1.bf16.msra.mxu0 0
        %1545 = vmatprep.subr.bf16.mxu0 0
        %1546 = vmatpush1.bf16.msra.mxu0 0
        %1547 = vmatprep.subr.bf16.mxu0 0
        %1548 = vmatpush1.bf16.msra.mxu0 0
        %1549 = vmatprep.subr.bf16.mxu0 0
        %1550 = vmatpush1.bf16.msra.mxu0 0
        %1551 = vmatprep.subr.bf16.mxu0 0
        %1552 = vmatpush1.bf16.msra.mxu0 0
        %1553 = vmatprep.subr.bf16.mxu0 0
        %1554 = vmatpush1.bf16.msra.mxu0 0
        %1555 = vmatprep.subr.bf16.mxu0 0
        %1556 = vmatpush1.bf16.msra.mxu0 0
        %1557 = vmatprep.subr.bf16.mxu0 0
        %1558 = vmatpush1.bf16.msra.mxu0 0
        %1559 = vmatprep.subr.bf16.mxu0 0
        %1560 = vmatpush1.bf16.msra.mxu0 0
        %1561 = vmatprep.subr.bf16.mxu0 0
        %1562 = vmatpush1.bf16.msra.mxu0 0
        %1563 = vmatprep.subr.bf16.mxu0 0
        %1564 = vmatpush1.bf16.msra.mxu0 0
        %1565 = vmatprep.subr.bf16.mxu0 0
        %1566 = vmatpush1.bf16.msra.mxu0 0
        %1567 = vmatprep.mubr.bf16.mxu0 0
        %1568 = vmatmul.mubr.bf16.gmra.mrb[0].mxu0 %v1533
        %v1569 = vpop.f32.mrb[0].mxu0
        %v1570 = vadd.f32 %v1295, %v1569
        %v1571 = vpop.f32.mrb[0].mxu0
        %v1572 = vadd.f32 %v1299, %v1571
        %v1573 = vpop.f32.mrb[0].mxu0
        %v1574 = vpop.f32.mrb[0].mxu0
        %1575 = vdwg.mxu0
        %1576 = vmatprep.subr.bf16.mxu0 %v1471
        %1577 = vmatpush1.bf16.msra.mxu0 %v1470
        %1578 = vmatprep.subr.bf16.mxu0 %v1487
        %1579 = vmatpush1.bf16.msra.mxu0 %v1486
        %1580 = vmatprep.subr.bf16.mxu0 0
        %1581 = vmatpush1.bf16.msra.mxu0 0
        %1582 = vmatprep.subr.bf16.mxu0 0
        %1583 = vmatpush1.bf16.msra.mxu0 0
        %1584 = vmatprep.subr.bf16.mxu0 0
        %1585 = vmatpush1.bf16.msra.mxu0 0
        %1586 = vmatprep.subr.bf16.mxu0 0
        %1587 = vmatpush1.bf16.msra.mxu0 0
        %1588 = vmatprep.subr.bf16.mxu0 0
        %1589 = vmatpush1.bf16.msra.mxu0 0
        %1590 = vmatprep.subr.bf16.mxu0 0
        %1591 = vmatpush1.bf16.msra.mxu0 0
        %1592 = vmatprep.subr.bf16.mxu0 0
        %1593 = vmatpush1.bf16.msra.mxu0 0
        %1594 = vmatprep.subr.bf16.mxu0 0
        %1595 = vmatpush1.bf16.msra.mxu0 0
        %1596 = vmatprep.subr.bf16.mxu0 0
        %1597 = vmatpush1.bf16.msra.mxu0 0
        %1598 = vmatprep.subr.bf16.mxu0 0
        %1599 = vmatpush1.bf16.msra.mxu0 0
        %1600 = vmatprep.subr.bf16.mxu0 0
        %1601 = vmatpush1.bf16.msra.mxu0 0
        %1602 = vmatprep.subr.bf16.mxu0 0
        %1603 = vmatpush1.bf16.msra.mxu0 0
        %1604 = vmatprep.subr.bf16.mxu0 0
        %1605 = vmatpush1.bf16.msra.mxu0 0
        %1606 = vmatprep.subr.bf16.mxu0 0
        %1607 = vmatpush1.bf16.msra.mxu0 0
        %1608 = vmatprep.mubr.bf16.mxu0 0
        %1609 = vmatmul.mubr.bf16.gmra.mrb[0].mxu0 %v1533
        %v1610 = vpop.f32.mrb[0].mxu0
        %v1611 = vadd.f32 %v1303, %v1610
        %v1612 = vpop.f32.mrb[0].mxu0
        %v1613 = vadd.f32 %v1307, %v1612
        %v1614 = vpop.f32.mrb[0].mxu0
        %v1615 = vpop.f32.mrb[0].mxu0
        %1616 = vdwg.mxu0
        %1617 = vmatprep.subr.bf16.mxu0 %v1473
        %1618 = vmatpush1.bf16.msra.mxu0 %v1472
        %1619 = vmatprep.subr.bf16.mxu0 %v1489
        %1620 = vmatpush1.bf16.msra.mxu0 %v1488
        %1621 = vmatprep.subr.bf16.mxu0 0
        %1622 = vmatpush1.bf16.msra.mxu0 0
        %1623 = vmatprep.subr.bf16.mxu0 0
        %1624 = vmatpush1.bf16.msra.mxu0 0
        %1625 = vmatprep.subr.bf16.mxu0 0
        %1626 = vmatpush1.bf16.msra.mxu0 0
        %1627 = vmatprep.subr.bf16.mxu0 0
        %1628 = vmatpush1.bf16.msra.mxu0 0
        %1629 = vmatprep.subr.bf16.mxu0 0
        %1630 = vmatpush1.bf16.msra.mxu0 0
        %1631 = vmatprep.subr.bf16.mxu0 0
        %1632 = vmatpush1.bf16.msra.mxu0 0
        %1633 = vmatprep.subr.bf16.mxu0 0
        %1634 = vmatpush1.bf16.msra.mxu0 0
        %1635 = vmatprep.subr.bf16.mxu0 0
        %1636 = vmatpush1.bf16.msra.mxu0 0
        %1637 = vmatprep.subr.bf16.mxu0 0
        %1638 = vmatpush1.bf16.msra.mxu0 0
        %1639 = vmatprep.subr.bf16.mxu0 0
        %1640 = vmatpush1.bf16.msra.mxu0 0
        %1641 = vmatprep.subr.bf16.mxu0 0
        %1642 = vmatpush1.bf16.msra.mxu0 0
        %1643 = vmatprep.subr.bf16.mxu0 0
        %1644 = vmatpush1.bf16.msra.mxu0 0
        %1645 = vmatprep.subr.bf16.mxu0 0
        %1646 = vmatpush1.bf16.msra.mxu0 0
        %1647 = vmatprep.subr.bf16.mxu0 0
        %1648 = vmatpush1.bf16.msra.mxu0 0
        %1649 = vmatprep.mubr.bf16.mxu0 0
        %1650 = vmatmul.mubr.bf16.gmra.mrb[0].mxu0 %v1533
        %v1651 = vpop.f32.mrb[0].mxu0
        %v1652 = vadd.f32 %v1311, %v1651
        %v1653 = vpop.f32.mrb[0].mxu0
        %v1654 = vadd.f32 %v1315, %v1653
        %v1655 = vpop.f32.mrb[0].mxu0
        %v1656 = vpop.f32.mrb[0].mxu0
        %1657 = vdwg.mxu0
        %1658 = vmatprep.subr.bf16.mxu0 %v1475
        %1659 = vmatpush1.bf16.msra.mxu0 %v1474
        %1660 = vmatprep.subr.bf16.mxu0 %v1491
        %1661 = vmatpush1.bf16.msra.mxu0 %v1490
        %1662 = vmatprep.subr.bf16.mxu0 0
        %1663 = vmatpush1.bf16.msra.mxu0 0
        %1664 = vmatprep.subr.bf16.mxu0 0
        %1665 = vmatpush1.bf16.msra.mxu0 0
        %1666 = vmatprep.subr.bf16.mxu0 0
        %1667 = vmatpush1.bf16.msra.mxu0 0
        %1668 = vmatprep.subr.bf16.mxu0 0
        %1669 = vmatpush1.bf16.msra.mxu0 0
        %1670 = vmatprep.subr.bf16.mxu0 0
        %1671 = vmatpush1.bf16.msra.mxu0 0
        %1672 = vmatprep.subr.bf16.mxu0 0
        %1673 = vmatpush1.bf16.msra.mxu0 0
        %1674 = vmatprep.subr.bf16.mxu0 0
        %1675 = vmatpush1.bf16.msra.mxu0 0
        %1676 = vmatprep.subr.bf16.mxu0 0
        %1677 = vmatpush1.bf16.msra.mxu0 0
        %1678 = vmatprep.subr.bf16.mxu0 0
        %1679 = vmatpush1.bf16.msra.mxu0 0
        %1680 = vmatprep.subr.bf16.mxu0 0
        %1681 = vmatpush1.bf16.msra.mxu0 0
        %1682 = vmatprep.subr.bf16.mxu0 0
        %1683 = vmatpush1.bf16.msra.mxu0 0
        %1684 = vmatprep.subr.bf16.mxu0 0
        %1685 = vmatpush1.bf16.msra.mxu0 0
        %1686 = vmatprep.subr.bf16.mxu0 0
        %1687 = vmatpush1.bf16.msra.mxu0 0
        %1688 = vmatprep.subr.bf16.mxu0 0
        %1689 = vmatpush1.bf16.msra.mxu0 0
        %1690 = vmatprep.mubr.bf16.mxu0 0
        %1691 = vmatmul.mubr.bf16.gmra.mrb[0].mxu0 %v1533
        %v1692 = vpop.f32.mrb[0].mxu0
        %v1693 = vadd.f32 %v1319, %v1692
        %v1694 = vpop.f32.mrb[0].mxu0
        %v1695 = vadd.f32 %v1323, %v1694
        %v1696 = vpop.f32.mrb[0].mxu0
        %v1697 = vpop.f32.mrb[0].mxu0
        %1698 = vdwg.mxu0
        %1699 = vmatprep.subr.bf16.mxu0 %v1477
        %1700 = vmatpush1.bf16.msra.mxu0 %v1476
        %1701 = vmatprep.subr.bf16.mxu0 %v1493
        %1702 = vmatpush1.bf16.msra.mxu0 %v1492
        %1703 = vmatprep.subr.bf16.mxu0 0
        %1704 = vmatpush1.bf16.msra.mxu0 0
        %1705 = vmatprep.subr.bf16.mxu0 0
        %1706 = vmatpush1.bf16.msra.mxu0 0
        %1707 = vmatprep.subr.bf16.mxu0 0
        %1708 = vmatpush1.bf16.msra.mxu0 0
        %1709 = vmatprep.subr.bf16.mxu0 0
        %1710 = vmatpush1.bf16.msra.mxu0 0
        %1711 = vmatprep.subr.bf16.mxu0 0
        %1712 = vmatpush1.bf16.msra.mxu0 0
        %1713 = vmatprep.subr.bf16.mxu0 0
        %1714 = vmatpush1.bf16.msra.mxu0 0
        %1715 = vmatprep.subr.bf16.mxu0 0
        %1716 = vmatpush1.bf16.msra.mxu0 0
        %1717 = vmatprep.subr.bf16.mxu0 0
        %1718 = vmatpush1.bf16.msra.mxu0 0
        %1719 = vmatprep.subr.bf16.mxu0 0
        %1720 = vmatpush1.bf16.msra.mxu0 0
        %1721 = vmatprep.subr.bf16.mxu0 0
        %1722 = vmatpush1.bf16.msra.mxu0 0
        %1723 = vmatprep.subr.bf16.mxu0 0
        %1724 = vmatpush1.bf16.msra.mxu0 0
        %1725 = vmatprep.subr.bf16.mxu0 0
        %1726 = vmatpush1.bf16.msra.mxu0 0
        %1727 = vmatprep.subr.bf16.mxu0 0
        %1728 = vmatpush1.bf16.msra.mxu0 0
        %1729 = vmatprep.subr.bf16.mxu0 0
        %1730 = vmatpush1.bf16.msra.mxu0 0
        %1731 = vmatprep.mubr.bf16.mxu0 0
        %1732 = vmatmul.mubr.bf16.gmra.mrb[0].mxu0 %v1533
        %v1733 = vpop.f32.mrb[0].mxu0
        %v1734 = vadd.f32 %v1327, %v1733
        %v1735 = vpop.f32.mrb[0].mxu0
        %v1736 = vadd.f32 %v1331, %v1735
        %v1737 = vpop.f32.mrb[0].mxu0
        %v1738 = vpop.f32.mrb[0].mxu0
        %1739 = vdwg.mxu0
        %1740 = vmatprep.subr.bf16.mxu0 %v1479
        %1741 = vmatpush1.bf16.msra.mxu0 %v1478
        %1742 = vmatprep.subr.bf16.mxu0 %v1495
        %1743 = vmatpush1.bf16.msra.mxu0 %v1494
        %1744 = vmatprep.subr.bf16.mxu0 0
        %1745 = vmatpush1.bf16.msra.mxu0 0
        %1746 = vmatprep.subr.bf16.mxu0 0
        %1747 = vmatpush1.bf16.msra.mxu0 0
        %1748 = vmatprep.subr.bf16.mxu0 0
        %1749 = vmatpush1.bf16.msra.mxu0 0
        %1750 = vmatprep.subr.bf16.mxu0 0
        %1751 = vmatpush1.bf16.msra.mxu0 0
        %1752 = vmatprep.subr.bf16.mxu0 0
        %1753 = vmatpush1.bf16.msra.mxu0 0
        %1754 = vmatprep.subr.bf16.mxu0 0
        %1755 = vmatpush1.bf16.msra.mxu0 0
        %1756 = vmatprep.subr.bf16.mxu0 0
        %1757 = vmatpush1.bf16.msra.mxu0 0
        %1758 = vmatprep.subr.bf16.mxu0 0
        %1759 = vmatpush1.bf16.msra.mxu0 0
        %1760 = vmatprep.subr.bf16.mxu0 0
        %1761 = vmatpush1.bf16.msra.mxu0 0
        %1762 = vmatprep.subr.bf16.mxu0 0
        %1763 = vmatpush1.bf16.msra.mxu0 0
        %1764 = vmatprep.subr.bf16.mxu0 0
        %1765 = vmatpush1.bf16.msra.mxu0 0
        %1766 = vmatprep.subr.bf16.mxu0 0
        %1767 = vmatpush1.bf16.msra.mxu0 0
        %1768 = vmatprep.subr.bf16.mxu0 0
        %1769 = vmatpush1.bf16.msra.mxu0 0
        %1770 = vmatprep.subr.bf16.mxu0 0
        %1771 = vmatpush1.bf16.msra.mxu0 0
        %1772 = vmatprep.mubr.bf16.mxu0 0
        %1773 = vmatmul.mubr.bf16.gmra.mrb[0].mxu0 %v1533
        %v1774 = vpop.f32.mrb[0].mxu0
        %v1775 = vadd.f32 %v1335, %v1774
        %v1776 = vpop.f32.mrb[0].mxu0
        %v1777 = vadd.f32 %v1339, %v1776
        %v1778 = vpop.f32.mrb[0].mxu0
        %v1779 = vpop.f32.mrb[0].mxu0
        %1780 = vdwg.mxu0
        %1781 = vmatprep.subr.bf16.mxu0 %v1481
        %1782 = vmatpush1.bf16.msra.mxu0 %v1480
        %1783 = vmatprep.subr.bf16.mxu0 %v1497
        %1784 = vmatpush1.bf16.msra.mxu0 %v1496
        %1785 = vmatprep.subr.bf16.mxu0 0
        %1786 = vmatpush1.bf16.msra.mxu0 0
        %1787 = vmatprep.subr.bf16.mxu0 0
        %1788 = vmatpush1.bf16.msra.mxu0 0
        %1789 = vmatprep.subr.bf16.mxu0 0
        %1790 = vmatpush1.bf16.msra.mxu0 0
        %1791 = vmatprep.subr.bf16.mxu0 0
        %1792 = vmatpush1.bf16.msra.mxu0 0
        %1793 = vmatprep.subr.bf16.mxu0 0
        %1794 = vmatpush1.bf16.msra.mxu0 0
        %1795 = vmatprep.subr.bf16.mxu0 0
        %1796 = vmatpush1.bf16.msra.mxu0 0
        %1797 = vmatprep.subr.bf16.mxu0 0
        %1798 = vmatpush1.bf16.msra.mxu0 0
        %1799 = vmatprep.subr.bf16.mxu0 0
        %1800 = vmatpush1.bf16.msra.mxu0 0
        %1801 = vmatprep.subr.bf16.mxu0 0
        %1802 = vmatpush1.bf16.msra.mxu0 0
        %1803 = vmatprep.subr.bf16.mxu0 0
        %1804 = vmatpush1.bf16.msra.mxu0 0
        %1805 = vmatprep.subr.bf16.mxu0 0
        %1806 = vmatpush1.bf16.msra.mxu0 0
        %1807 = vmatprep.subr.bf16.mxu0 0
        %1808 = vmatpush1.bf16.msra.mxu0 0
        %1809 = vmatprep.subr.bf16.mxu0 0
        %1810 = vmatpush1.bf16.msra.mxu0 0
        %1811 = vmatprep.subr.bf16.mxu0 0
        %1812 = vmatpush1.bf16.msra.mxu0 0
        %1813 = vmatprep.mubr.bf16.mxu0 0
        %1814 = vmatmul.mubr.bf16.gmra.mrb[0].mxu0 %v1533
        %v1815 = vpop.f32.mrb[0].mxu0
        %v1816 = vadd.f32 %v1343, %v1815
        %v1817 = vpop.f32.mrb[0].mxu0
        %v1818 = vadd.f32 %v1347, %v1817
        %v1819 = vpop.f32.mrb[0].mxu0
        %v1820 = vpop.f32.mrb[0].mxu0
        %1821 = vdwg.mxu0
        %1822 = vmatprep.subr.bf16.mxu0 %v1483
        %1823 = vmatpush1.bf16.msra.mxu0 %v1482
        %1824 = vmatprep.subr.bf16.mxu0 %v1499
        %1825 = vmatpush1.bf16.msra.mxu0 %v1498
        %1826 = vmatprep.subr.bf16.mxu0 0
        %1827 = vmatpush1.bf16.msra.mxu0 0
        %1828 = vmatprep.subr.bf16.mxu0 0
        %1829 = vmatpush1.bf16.msra.mxu0 0
        %1830 = vmatprep.subr.bf16.mxu0 0
        %1831 = vmatpush1.bf16.msra.mxu0 0
        %1832 = vmatprep.subr.bf16.mxu0 0
        %1833 = vmatpush1.bf16.msra.mxu0 0
        %1834 = vmatprep.subr.bf16.mxu0 0
        %1835 = vmatpush1.bf16.msra.mxu0 0
        %1836 = vmatprep.subr.bf16.mxu0 0
        %1837 = vmatpush1.bf16.msra.mxu0 0
        %1838 = vmatprep.subr.bf16.mxu0 0
        %1839 = vmatpush1.bf16.msra.mxu0 0
        %1840 = vmatprep.subr.bf16.mxu0 0
        %1841 = vmatpush1.bf16.msra.mxu0 0
        %1842 = vmatprep.subr.bf16.mxu0 0
        %1843 = vmatpush1.bf16.msra.mxu0 0
        %1844 = vmatprep.subr.bf16.mxu0 0
        %1845 = vmatpush1.bf16.msra.mxu0 0
        %1846 = vmatprep.subr.bf16.mxu0 0
        %1847 = vmatpush1.bf16.msra.mxu0 0
        %1848 = vmatprep.subr.bf16.mxu0 0
        %1849 = vmatpush1.bf16.msra.mxu0 0
        %1850 = vmatprep.subr.bf16.mxu0 0
        %1851 = vmatpush1.bf16.msra.mxu0 0
        %1852 = vmatprep.subr.bf16.mxu0 0
        %1853 = vmatpush1.bf16.msra.mxu0 0
        %1854 = vmatprep.mubr.bf16.mxu0 0
        %1855 = vmatmul.mubr.bf16.gmra.mrb[0].mxu0 %v1533
        %v1856 = vpop.f32.mrb[0].mxu0
        %v1857 = vadd.f32 %v1351, %v1856
        %v1858 = vpop.f32.mrb[0].mxu0
        %v1859 = vadd.f32 %v1355, %v1858
        %v1860 = vpop.f32.mrb[0].mxu0
        %v1861 = vpop.f32.mrb[0].mxu0
        %1862 = vdwg.mxu0
        %1863 = vst [vmem:[%s299] sm:$0xff] %v1570
        %1864 = vst [vmem:[%s299 + $0x8] sm:$0xff] %v1572
        %1865 = vst [vmem:[%s299 + $0x10] sm:$0xff] %v1611
        %1866 = vst [vmem:[%s299 + $0x18] sm:$0xff] %v1613
        %1867 = vst [vmem:[%s299 + $0x20] sm:$0xff] %v1652
        %1868 = vst [vmem:[%s299 + $0x28] sm:$0xff] %v1654
        %1869 = vst [vmem:[%s299 + $0x30] sm:$0xff] %v1693
        %1870 = vst [vmem:[%s299 + $0x38] sm:$0xff] %v1695
        %1871 = vst [vmem:[%s299 + $0x40] sm:$0xff] %v1734
        %1872 = vst [vmem:[%s299 + $0x48] sm:$0xff] %v1736
        %1873 = vst [vmem:[%s299 + $0x50] sm:$0xff] %v1775
        %1874 = vst [vmem:[%s299 + $0x58] sm:$0xff] %v1777
        %1875 = vst [vmem:[%s299 + $0x60] sm:$0xff] %v1816
        %1876 = vst [vmem:[%s299 + $0x68] sm:$0xff] %v1818
        %1877 = vst [vmem:[%s299 + $0x70] sm:$0xff] %v1857
        %1878 = vst [vmem:[%s299 + $0x78] sm:$0xff] %v1859
        %s1879 = smul.u32 16, %s15
        %p1880 = scmp.lt.s32.totalorder %s1879, 31
        %s1881 = scalar_select %p1880, %s1879, 31
        %s1882 = smul.addr %s1881, 8
        %s1883 = scalar_lea.vmem %s4, %s1882
        // Predicated region
        $region60: #{gene_memory_network_forward.1} parent=54 // pred_check
          %p1884 = pneg %p127
        $region61: #{gene_memory_network_forward.1} parent=54 // pred_check_branch
          %1886 = sbr.rel (%p1884) target = $region63
        $region62: #{gene_memory_network_forward.1} parent=54 // pred_region
          %s1887 = smul.u32 16, %s15
        $region63: #{gene_memory_network_forward.1} parent=54 // pred_fallthru
          _
      $region55: #{gene_memory_network_forward.1} parent=5 // pred_fallthru
        _
      %p1888 = scmp.le.s32.totalorder 2, %s10
      // Predicated region
      $region64: #{gene_memory_network_forward.1} parent=5 // pred_check
        %p1889 = pneg %p1888
      $region65: #{gene_memory_network_forward.1} parent=5 // pred_check_branch
        %1891 = sbr.rel (%p1889) target = $region67
      $region66: #{gene_memory_network_forward.1} parent=5 // pred_region
        %s1892 = ssub.s32 %s10, 2
        // Predicated region
        $region68: #{gene_memory_network_forward.1} parent=66 // pred_check
          %p1893 = pneg %p133
        $region69: #{gene_memory_network_forward.1} parent=66 // pred_check_branch
          %1895 = sbr.rel (%p1893) target = $region71
        $region70: #{gene_memory_network_forward.1} parent=66 // pred_region
          %s1896 = smul.u32 16, %s16
          %p1897 = scmp.lt.s32.totalorder %s1896, 31
          %s1898 = scalar_select %p1897, %s1896, 31
          %s1899 = smul.addr %s1898, 8
          %s1900 = scalar_lea.vmem %s4, %s1899
        $region71: #{gene_memory_network_forward.1} parent=66 // pred_fallthru
          _
      $region67: #{gene_memory_network_forward.1} parent=5 // pred_fallthru
        _
    $region6: #{gene_memory_network_forward.1} parent=1 // loop_footer
      %s14 = sadd.s32 1, %s10
    $region7: #{gene_memory_network_forward.1} parent=1 // loop_footer_branch
      %9 = sbr.rel target = $region3
    $region8: #{gene_memory_network_forward.1} parent=1 // loop_exit
      _

</llo_original>
